<compile_context>
chip_gen: v5e
topology: v5e:2x2
jax: 0.10.0
libtpu: 0.0.40
codegen_flags: <defaults>
</compile_context>

<pallas_src>
import math
from functools import partial

import jax
import jax.numpy as jnp
from jax import lax
from jax.experimental import pallas as pl
from jax.experimental.pallas import tpu as pltpu


def _round_up(x, m):
    return ((x + m - 1) // m) * m


def _res_block_kernel(x_ref, w_ref, b_ref, o_ref, *, KH, KW, Wp, nrows, res_start):
    """Fused conv (KH*KW shifted matmuls) + bias + swish + residual add.

    x_ref: (1, rows_pad, C)   padded, row-flattened NHWC image (input dtype)
    w_ref: (KH*KW, C, Cout)   conv weights, bf16, resident across the grid
    b_ref: (1, Cout)          bias, f32, resident
    o_ref: (1, nrows, Cout)   output rows in (oh*Wp + ow) layout
    """
    cout = o_ref.shape[-1]
    acc = jnp.zeros((nrows, cout), jnp.float32)
    for kh in range(KH):
        for kw in range(KW):
            start = kh * Wp + kw               # spatial shift == contiguous row slice
            a = x_ref[0, start:start + nrows, :].astype(jnp.bfloat16)
            acc = acc + jnp.dot(a, w_ref[kh * KW + kw],
                                preferred_element_type=jnp.float32)
    z = acc + b_ref[...]                        # bias (f32)
    z = z * jax.nn.sigmoid(z)                   # swish on VPU/EUP (f32)
    # Residual = interior of the same padded block (full f32 precision, no extra stream).
    resid = x_ref[0, res_start:res_start + nrows, :].astype(jnp.float32)
    o_ref[0] = (resid + z).astype(o_ref.dtype)


def res_block_forward(x, weight, bias, *, stride=1, padding=0):
    """Pallas TPU forward matching res_block: y = x + swish(conv2d(x) + b)."""
    N, C, H, W = x.shape
    Cout, Cin, KH, KW = weight.shape
    if Cin != C or Cout != C:
        raise ValueError("res_block requires in_channels == out_channels")
    sh, sw = (stride, stride) if isinstance(stride, int) else stride
    ph, pw = (padding, padding) if isinstance(padding, int) else padding
    OH = (H + 2 * ph - KH) // sh + 1
    OW = (W + 2 * pw - KW) // sw + 1
    if (OH, OW) != (H, W):
        raise ValueError("residual add requires conv output spatial == input spatial")
    if (sh, sw) != (1, 1):
        # TODO(synk): general strides need a strided row-slice formulation.
        raise ValueError("fused kernel assumes stride 1 (implied by the residual add)")

    Hp, Wp = H + 2 * ph, W + 2 * pw
    nrows = OH * Wp                       # output rows; columns [OW, Wp) are garbage
    rows_pad = Hp * Wp + (KW - 1)         # guard rows: every shifted slice stays in-bounds
    res_start = ph * Wp + pw

    # --- glue: one pass of layout work, no data duplication -------------------
    x_nhwc = jnp.transpose(x, (0, 2, 3, 1))                       # (N,H,W,C)
    x_pad = jnp.pad(x_nhwc, ((0, 0), (ph, ph), (pw, pw), (0, 0))) # (N,Hp,Wp,C)
    x_flat = x_pad.reshape(N, Hp * Wp, C)
    x_flat = jnp.pad(x_flat, ((0, 0), (0, rows_pad - Hp * Wp), (0, 0)))

    w_k = jnp.transpose(weight, (2, 3, 1, 0)).reshape(KH * KW, C, Cout)
    w_k = w_k.astype(jnp.bfloat16)                                # bf16 MXU operand
    b2 = bias.reshape(1, Cout).astype(jnp.float32)

    # --- VMEM budget (generation-aware) ---------------------------------------
    try:
        vmem_cap = int(pltpu.get_tpu_info().vmem_capacity_bytes)
    except Exception:
        vmem_cap = 64 * 1024 * 1024       # conservative (v7x per-TC)
    vmem_limit = min(vmem_cap * 3 // 4, 112 * 1024 * 1024)

    itemsize = jnp.dtype(x.dtype).itemsize
    c_lane = _round_up(C, 128)
    in_blk = _round_up(rows_pad, 8) * c_lane * itemsize
    out_blk = _round_up(nrows, 8) * c_lane * itemsize
    w_blk = KH * KW * _round_up(C, 8) * _round_up(Cout, 128) * 2
    # 2x for double-buffered input/output/weights (weights are tiny here, so the
    # extra resident copy is negligible) + one f32 accumulator + slack.
    need = 2 * (in_blk + out_blk + w_blk) + out_blk + (1 << 20)
    if need > vmem_limit:
        # TODO(synk): for images/channels this large, row-tile each image with a
        # (tile + KH-1)-row halo via manual make_async_copy double-buffering.
        raise ValueError(f"per-image block needs ~{need} B VMEM > limit {vmem_limit} B")

    kernel = partial(_res_block_kernel, KH=KH, KW=KW, Wp=Wp,
                     nrows=nrows, res_start=res_start)

    cost = pl.CostEstimate(
        flops=2 * N * nrows * C * Cout * KH * KW,
        transcendentals=N * nrows * Cout,
        bytes_accessed=(x_flat.size * itemsize + w_k.size * 2 + b2.size * 4
                        + N * nrows * Cout * itemsize),
    )

    out = pl.pallas_call(
        kernel,
        out_shape=jax.ShapeDtypeStruct((N, nrows, Cout), x.dtype),
        grid=(N,),
        in_specs=[
            pl.BlockSpec((1, rows_pad, C), lambda n: (n, 0, 0)),     # per-image input
            pl.BlockSpec((KH * KW, C, Cout), lambda n: (0, 0, 0)),   # weights (resident)
            pl.BlockSpec((1, Cout), lambda n: (0, 0)),               # bias (resident)
        ],
        out_specs=pl.BlockSpec((1, nrows, Cout), lambda n: (n, 0, 0)),
        compiler_params=pltpu.CompilerParams(
            dimension_semantics=("parallel",),
            vmem_limit_bytes=vmem_limit,
        ),
        cost_estimate=cost,
    )(x_flat, w_k, b2)

    # Drop the (Wp - OW) garbage columns, back to NCHW.
    y = out.reshape(N, OH, Wp, Cout)[:, :, :OW, :]
    return jnp.transpose(y, (0, 3, 1, 2))


if __name__ == "__main__":
    key = jax.random.PRNGKey(0)
    k1, k2, k3 = jax.random.split(key, 3)

    # Small shapes consistent with the module: batch=2, channels=4, 16x16 spatial,
    # covsiz=3, stride=1, padding=1 (residual requires same spatial dims).
    N, C, H, W = 2, 4, 16, 16
    covsiz, stride, padding = 3, 1, 1

    x = jax.random.normal(k1, (N, C, H, W), jnp.float32)
    weight = jax.random.normal(k2, (C, C, covsiz, covsiz), jnp.float32)
    weight = weight * (1.0 / math.sqrt(C * covsiz * covsiz))
    bias = jax.random.normal(k3, (C,), jnp.float32) * 0.1

    # Make conv operands exactly bf16-representable so the bf16 MXU path agrees
    # with the XLA f32 reference conv to f32-accumulation noise.
    x = x.astype(jnp.bfloat16).astype(jnp.float32)
    weight = weight.astype(jnp.bfloat16).astype(jnp.float32)

    y = res_block_forward(x, weight, bias, stride=stride, padding=padding)
    y = jax.block_until_ready(y)

    # Pure-JAX reference: y = x + swish(conv2d(x) + bias)
    conv = lax.conv_general_dilated(
        x, weight, window_strides=(stride, stride),
        padding=[(padding, padding), (padding, padding)],
        dimension_numbers=("NCHW", "OIHW", "NCHW"))
    conv = conv + bias[None, :, None, None]
    y_ref = x + conv * jax.nn.sigmoid(conv)

    assert y.shape == (N, C, H, W), y.shape
    max_err = float(jnp.max(jnp.abs(y - y_ref)))
    assert jnp.allclose(y, y_ref, atol=1e-4, rtol=1e-4), max_err
    print("KERNEL_OK")
</pallas_src>

<mosaic_0001>
module attributes {stable_mosaic.version = 11 : i64} {
  func.func @_res_block_kernel(%arg0: i32, %arg1: memref<1x326x4xf32, #tpu.memory_space<vmem>>, %arg2: memref<9x4x4xbf16, #tpu.memory_space<vmem>>, %arg3: memref<1x4xf32, #tpu.memory_space<vmem>>, %arg4: memref<1x288x4xf32, #tpu.memory_space<vmem>>) attributes {dimension_semantics = [#tpu.dimension_semantics<parallel>], iteration_bounds = array<i64: 2>, scalar_prefetch = 0 : i64, scratch_operands = 0 : i64, tpu.core_type = #tpu.core_type<tc>, window_params = [{transform_indices = @transform_0, window_bounds = array<i64: 1, 326, 4>}, {pipeline_mode = #tpu.pipeline_mode<synchronous>, transform_indices = @transform_1, window_bounds = array<i64: 9, 4, 4>}, {pipeline_mode = #tpu.pipeline_mode<synchronous>, transform_indices = @transform_2, window_bounds = array<i64: 1, 4>}, {transform_indices = @transform_3, window_bounds = array<i64: 1, 288, 4>}]} {
    %cst = arith.constant 0.000000e+00 : f32
    %0 = vector.broadcast %cst : f32 to vector<288x4xf32>
    %c0 = arith.constant 0 : index
    %c0_0 = arith.constant 0 : index
    %c0_1 = arith.constant 0 : index
    %1 = vector.load %arg1[%c0, %c0_0, %c0_1] : memref<1x326x4xf32, #tpu.memory_space<vmem>>, vector<1x288x4xf32>
    %2 = vector.shape_cast %1 : vector<1x288x4xf32> to vector<288x4xf32>
    %3 = arith.truncf %2 : vector<288x4xf32> to vector<288x4xbf16>
    %c0_2 = arith.constant 0 : index
    %c0_3 = arith.constant 0 : index
    %c0_4 = arith.constant 0 : index
    %4 = vector.load %arg2[%c0_2, %c0_3, %c0_4] : memref<9x4x4xbf16, #tpu.memory_space<vmem>>, vector<1x4x4xbf16>
    %5 = vector.shape_cast %4 : vector<1x4x4xbf16> to vector<4x4xbf16>
    %cst_5 = arith.constant dense<0.000000e+00> : vector<288x4xf32>
    %6 = tpu.matmul %3, %5, %cst_5 {dimension_numbers = #tpu.dot_dimension_numbers<[1], [0], [0], [1], [0, 0, 1, 1], [], []>} : vector<288x4xbf16>, vector<4x4xbf16>, vector<288x4xf32> -> vector<288x4xf32>
    %7 = arith.addf %0, %6 : vector<288x4xf32>
    %c0_6 = arith.constant 0 : index
    %c1 = arith.constant 1 : index
    %c0_7 = arith.constant 0 : index
    %8 = vector.load %arg1[%c0_6, %c1, %c0_7] : memref<1x326x4xf32, #tpu.memory_space<vmem>>, vector<1x288x4xf32>
    %9 = vector.shape_cast %8 : vector<1x288x4xf32> to vector<288x4xf32>
    %10 = arith.truncf %9 : vector<288x4xf32> to vector<288x4xbf16>
    %c1_8 = arith.constant 1 : index
    %c0_9 = arith.constant 0 : index
    %c0_10 = arith.constant 0 : index
    %11 = vector.load %arg2[%c1_8, %c0_9, %c0_10] : memref<9x4x4xbf16, #tpu.memory_space<vmem>>, vector<1x4x4xbf16>
    %12 = vector.shape_cast %11 : vector<1x4x4xbf16> to vector<4x4xbf16>
    %cst_11 = arith.constant dense<0.000000e+00> : vector<288x4xf32>
    %13 = tpu.matmul %10, %12, %cst_11 {dimension_numbers = #tpu.dot_dimension_numbers<[1], [0], [0], [1], [0, 0, 1, 1], [], []>} : vector<288x4xbf16>, vector<4x4xbf16>, vector<288x4xf32> -> vector<288x4xf32>
    %14 = arith.addf %7, %13 : vector<288x4xf32>
    %c0_12 = arith.constant 0 : index
    %c2 = arith.constant 2 : index
    %c0_13 = arith.constant 0 : index
    %15 = vector.load %arg1[%c0_12, %c2, %c0_13] : memref<1x326x4xf32, #tpu.memory_space<vmem>>, vector<1x288x4xf32>
    %16 = vector.shape_cast %15 : vector<1x288x4xf32> to vector<288x4xf32>
    %17 = arith.truncf %16 : vector<288x4xf32> to vector<288x4xbf16>
    %c2_14 = arith.constant 2 : index
    %c0_15 = arith.constant 0 : index
    %c0_16 = arith.constant 0 : index
    %18 = vector.load %arg2[%c2_14, %c0_15, %c0_16] : memref<9x4x4xbf16, #tpu.memory_space<vmem>>, vector<1x4x4xbf16>
    %19 = vector.shape_cast %18 : vector<1x4x4xbf16> to vector<4x4xbf16>
    %cst_17 = arith.constant dense<0.000000e+00> : vector<288x4xf32>
    %20 = tpu.matmul %17, %19, %cst_17 {dimension_numbers = #tpu.dot_dimension_numbers<[1], [0], [0], [1], [0, 0, 1, 1], [], []>} : vector<288x4xbf16>, vector<4x4xbf16>, vector<288x4xf32> -> vector<288x4xf32>
    %21 = arith.addf %14, %20 : vector<288x4xf32>
    %c0_18 = arith.constant 0 : index
    %c18 = arith.constant 18 : index
    %c0_19 = arith.constant 0 : index
    %22 = vector.load %arg1[%c0_18, %c18, %c0_19] : memref<1x326x4xf32, #tpu.memory_space<vmem>>, vector<1x288x4xf32>
    %23 = vector.shape_cast %22 : vector<1x288x4xf32> to vector<288x4xf32>
    %24 = arith.truncf %23 : vector<288x4xf32> to vector<288x4xbf16>
    %c3 = arith.constant 3 : index
    %c0_20 = arith.constant 0 : index
    %c0_21 = arith.constant 0 : index
    %25 = vector.load %arg2[%c3, %c0_20, %c0_21] : memref<9x4x4xbf16, #tpu.memory_space<vmem>>, vector<1x4x4xbf16>
    %26 = vector.shape_cast %25 : vector<1x4x4xbf16> to vector<4x4xbf16>
    %cst_22 = arith.constant dense<0.000000e+00> : vector<288x4xf32>
    %27 = tpu.matmul %24, %26, %cst_22 {dimension_numbers = #tpu.dot_dimension_numbers<[1], [0], [0], [1], [0, 0, 1, 1], [], []>} : vector<288x4xbf16>, vector<4x4xbf16>, vector<288x4xf32> -> vector<288x4xf32>
    %28 = arith.addf %21, %27 : vector<288x4xf32>
    %c0_23 = arith.constant 0 : index
    %c19 = arith.constant 19 : index
    %c0_24 = arith.constant 0 : index
    %29 = vector.load %arg1[%c0_23, %c19, %c0_24] : memref<1x326x4xf32, #tpu.memory_space<vmem>>, vector<1x288x4xf32>
    %30 = vector.shape_cast %29 : vector<1x288x4xf32> to vector<288x4xf32>
    %31 = arith.truncf %30 : vector<288x4xf32> to vector<288x4xbf16>
    %c4 = arith.constant 4 : index
    %c0_25 = arith.constant 0 : index
    %c0_26 = arith.constant 0 : index
    %32 = vector.load %arg2[%c4, %c0_25, %c0_26] : memref<9x4x4xbf16, #tpu.memory_space<vmem>>, vector<1x4x4xbf16>
    %33 = vector.shape_cast %32 : vector<1x4x4xbf16> to vector<4x4xbf16>
    %cst_27 = arith.constant dense<0.000000e+00> : vector<288x4xf32>
    %34 = tpu.matmul %31, %33, %cst_27 {dimension_numbers = #tpu.dot_dimension_numbers<[1], [0], [0], [1], [0, 0, 1, 1], [], []>} : vector<288x4xbf16>, vector<4x4xbf16>, vector<288x4xf32> -> vector<288x4xf32>
    %35 = arith.addf %28, %34 : vector<288x4xf32>
    %c0_28 = arith.constant 0 : index
    %c20 = arith.constant 20 : index
    %c0_29 = arith.constant 0 : index
    %36 = vector.load %arg1[%c0_28, %c20, %c0_29] : memref<1x326x4xf32, #tpu.memory_space<vmem>>, vector<1x288x4xf32>
    %37 = vector.shape_cast %36 : vector<1x288x4xf32> to vector<288x4xf32>
    %38 = arith.truncf %37 : vector<288x4xf32> to vector<288x4xbf16>
    %c5 = arith.constant 5 : index
    %c0_30 = arith.constant 0 : index
    %c0_31 = arith.constant 0 : index
    %39 = vector.load %arg2[%c5, %c0_30, %c0_31] : memref<9x4x4xbf16, #tpu.memory_space<vmem>>, vector<1x4x4xbf16>
    %40 = vector.shape_cast %39 : vector<1x4x4xbf16> to vector<4x4xbf16>
    %cst_32 = arith.constant dense<0.000000e+00> : vector<288x4xf32>
    %41 = tpu.matmul %38, %40, %cst_32 {dimension_numbers = #tpu.dot_dimension_numbers<[1], [0], [0], [1], [0, 0, 1, 1], [], []>} : vector<288x4xbf16>, vector<4x4xbf16>, vector<288x4xf32> -> vector<288x4xf32>
    %42 = arith.addf %35, %41 : vector<288x4xf32>
    %c0_33 = arith.constant 0 : index
    %c36 = arith.constant 36 : index
    %c0_34 = arith.constant 0 : index
    %43 = vector.load %arg1[%c0_33, %c36, %c0_34] : memref<1x326x4xf32, #tpu.memory_space<vmem>>, vector<1x288x4xf32>
    %44 = vector.shape_cast %43 : vector<1x288x4xf32> to vector<288x4xf32>
    %45 = arith.truncf %44 : vector<288x4xf32> to vector<288x4xbf16>
    %c6 = arith.constant 6 : index
    %c0_35 = arith.constant 0 : index
    %c0_36 = arith.constant 0 : index
    %46 = vector.load %arg2[%c6, %c0_35, %c0_36] : memref<9x4x4xbf16, #tpu.memory_space<vmem>>, vector<1x4x4xbf16>
    %47 = vector.shape_cast %46 : vector<1x4x4xbf16> to vector<4x4xbf16>
    %cst_37 = arith.constant dense<0.000000e+00> : vector<288x4xf32>
    %48 = tpu.matmul %45, %47, %cst_37 {dimension_numbers = #tpu.dot_dimension_numbers<[1], [0], [0], [1], [0, 0, 1, 1], [], []>} : vector<288x4xbf16>, vector<4x4xbf16>, vector<288x4xf32> -> vector<288x4xf32>
    %49 = arith.addf %42, %48 : vector<288x4xf32>
    %c0_38 = arith.constant 0 : index
    %c37 = arith.constant 37 : index
    %c0_39 = arith.constant 0 : index
    %50 = vector.load %arg1[%c0_38, %c37, %c0_39] : memref<1x326x4xf32, #tpu.memory_space<vmem>>, vector<1x288x4xf32>
    %51 = vector.shape_cast %50 : vector<1x288x4xf32> to vector<288x4xf32>
    %52 = arith.truncf %51 : vector<288x4xf32> to vector<288x4xbf16>
    %c7 = arith.constant 7 : index
    %c0_40 = arith.constant 0 : index
    %c0_41 = arith.constant 0 : index
    %53 = vector.load %arg2[%c7, %c0_40, %c0_41] : memref<9x4x4xbf16, #tpu.memory_space<vmem>>, vector<1x4x4xbf16>
    %54 = vector.shape_cast %53 : vector<1x4x4xbf16> to vector<4x4xbf16>
    %cst_42 = arith.constant dense<0.000000e+00> : vector<288x4xf32>
    %55 = tpu.matmul %52, %54, %cst_42 {dimension_numbers = #tpu.dot_dimension_numbers<[1], [0], [0], [1], [0, 0, 1, 1], [], []>} : vector<288x4xbf16>, vector<4x4xbf16>, vector<288x4xf32> -> vector<288x4xf32>
    %56 = arith.addf %49, %55 : vector<288x4xf32>
    %c0_43 = arith.constant 0 : index
    %c38 = arith.constant 38 : index
    %c0_44 = arith.constant 0 : index
    %57 = vector.load %arg1[%c0_43, %c38, %c0_44] : memref<1x326x4xf32, #tpu.memory_space<vmem>>, vector<1x288x4xf32>
    %58 = vector.shape_cast %57 : vector<1x288x4xf32> to vector<288x4xf32>
    %59 = arith.truncf %58 : vector<288x4xf32> to vector<288x4xbf16>
    %c8 = arith.constant 8 : index
    %c0_45 = arith.constant 0 : index
    %c0_46 = arith.constant 0 : index
    %60 = vector.load %arg2[%c8, %c0_45, %c0_46] : memref<9x4x4xbf16, #tpu.memory_space<vmem>>, vector<1x4x4xbf16>
    %61 = vector.shape_cast %60 : vector<1x4x4xbf16> to vector<4x4xbf16>
    %cst_47 = arith.constant dense<0.000000e+00> : vector<288x4xf32>
    %62 = tpu.matmul %59, %61, %cst_47 {dimension_numbers = #tpu.dot_dimension_numbers<[1], [0], [0], [1], [0, 0, 1, 1], [], []>} : vector<288x4xbf16>, vector<4x4xbf16>, vector<288x4xf32> -> vector<288x4xf32>
    %63 = arith.addf %56, %62 : vector<288x4xf32>
    %c0_48 = arith.constant 0 : index
    %c0_49 = arith.constant 0 : index
    %64 = vector.load %arg3[%c0_48, %c0_49] : memref<1x4xf32, #tpu.memory_space<vmem>>, vector<1x4xf32>
    %65 = vector.broadcast %64 : vector<1x4xf32> to vector<288x4xf32>
    %66 = arith.addf %63, %65 : vector<288x4xf32>
    %67 = arith.negf %66 : vector<288x4xf32>
    %68 = math.exp %67 : vector<288x4xf32>
    %cst_50 = arith.constant 1.000000e+00 : f32
    %69 = vector.broadcast %cst_50 : f32 to vector<288x4xf32>
    %70 = arith.addf %69, %68 : vector<288x4xf32>
    %71 = arith.divf %69, %70 : vector<288x4xf32>
    %72 = arith.mulf %66, %71 : vector<288x4xf32>
    %c0_51 = arith.constant 0 : index
    %c19_52 = arith.constant 19 : index
    %c0_53 = arith.constant 0 : index
    %73 = vector.load %arg1[%c0_51, %c19_52, %c0_53] : memref<1x326x4xf32, #tpu.memory_space<vmem>>, vector<1x288x4xf32>
    %74 = vector.shape_cast %73 : vector<1x288x4xf32> to vector<288x4xf32>
    %75 = arith.addf %74, %72 : vector<288x4xf32>
    %c0_54 = arith.constant 0 : index
    %c0_55 = arith.constant 0 : index
    %c0_56 = arith.constant 0 : index
    %76 = vector.load %arg4[%c0_54, %c0_55, %c0_56] : memref<1x288x4xf32, #tpu.memory_space<vmem>>, vector<1x288x4xf32>
    %77 = vector.shape_cast %76 : vector<1x288x4xf32> to vector<288x4xf32>
    %78 = vector.shape_cast %75 : vector<288x4xf32> to vector<1x288x4xf32>
    tpu.vector_store %arg4[%c0_54, %c0_55, %c0_56], %78 {strides = array<i32>} : memref<1x288x4xf32, #tpu.memory_space<vmem>>, vector<1x288x4xf32>,
    return
  }
  func.func @transform_0(%arg0: i32) -> (i32, i32, i32) {
    %c0_i32 = arith.constant 0 : i32
    %c0_i32_0 = arith.constant 0 : i32
    %c0_i32_1 = arith.constant 0 : i32
    return %arg0, %c0_i32, %c0_i32_0 : i32, i32, i32
  }
  func.func @transform_1(%arg0: i32) -> (i32, i32, i32) {
    %c0_i32 = arith.constant 0 : i32
    %c0_i32_0 = arith.constant 0 : i32
    %c0_i32_1 = arith.constant 0 : i32
    %c0_i32_2 = arith.constant 0 : i32
    return %c0_i32, %c0_i32_0, %c0_i32_1 : i32, i32, i32
  }
  func.func @transform_2(%arg0: i32) -> (i32, i32) {
    %c0_i32 = arith.constant 0 : i32
    %c0_i32_0 = arith.constant 0 : i32
    %c0_i32_1 = arith.constant 0 : i32
    return %c0_i32, %c0_i32_0 : i32, i32
  }
  func.func @transform_3(%arg0: i32) -> (i32, i32, i32) {
    %c0_i32 = arith.constant 0 : i32
    %c0_i32_0 = arith.constant 0 : i32
    %c0_i32_1 = arith.constant 0 : i32
    return %arg0, %c0_i32, %c0_i32_0 : i32, i32, i32
  }
}

</mosaic_0001>

<llo_original>
// kernel: tpu_custom_call.1
$region0: #{tpu_custom_call.1}
  #allocation0 [shape = 'u32[]', space=smem, size = 0x4, offset = 0x4, fixed_abs, tag = 'smem constant byte address 0x4 - core index']
  #allocation1 [shape = 'u32[72,128]{1,0:T(1,128)}', space=vmem, size = 0x9000, scoped, tag = 'internal scratch']
  %s0 = inlined_call_operand.vmem [shape: f32[2,326,4], index: 0, kind: input, shape index: {}]
  %s1 = inlined_call_operand.vmem [shape: bf16[9,4,4], index: 1, kind: input, shape index: {}]
  %s2 = inlined_call_operand.vmem [shape: f32[1,4], index: 2, kind: input, shape index: {}]
  %s3 = inlined_call_operand.vmem [shape: f32[2,288,4], index: 3, kind: output, shape index: {}]
  %s4 = sld [smem:[#allocation0]]
  $region45: #{tpu_custom_call.1} parent=0
    _
  %s6 = ssub.s32 1, %s4
  %s7 = scalar_select 0, %s6, %s4
  loop: start=0, step=1, limit=4
  $region2: #{tpu_custom_call.1} parent=0 // loop_pre_header
    _
  $region3: #{tpu_custom_call.1} parent=0 // loop_header
    %s9 = sphi 0, %s13
    %p10 = scmp.ge.s32.totalorder %s9, 4
    %s19 = sphi 0, %s21
    %s22 = sphi 0, %s19
    %s23 = sphi 0, %s22
    %s39 = sphi 0, %s23
    %s43 = sphi 0, %s43
    %s45 = sphi 0, %s43
    %s46 = sphi 0, %s45
    %s60 = sphi 0, %s46
    %s64 = sphi 0, %s64
    %s66 = sphi 0, %s64
    %s67 = sphi 0, %s66
    %s81 = sphi 0, %s67
    %s87 = sphi 0, %s89
    %s90 = sphi 0, %s87
    %s91 = sphi 0, %s90
    %s107 = sphi 0, %s91
  $region4: #{tpu_custom_call.1} parent=0 // loop_header_branch
    %12 = sbr.rel (%p10) target = $region8
  $region5: #{tpu_custom_call.1} parent=0 // loop_body
    %s14 = ssub.s32 %s9, 1
    %s15 = ssub.s32 %s9, 2
    %s16 = sadd.s32 %s9, 1
    %s17 = ssub.s32 %s9, %s16
    %p18 = scmp.eq.s32.totalorder %s17, 0
    %s20 = sadd.s32 %s19, 1
    %s21 = scalar_select %p18, %s19, %s20
    %p24 = pneg %p18
    %p25 = scmp.eq.s32.totalorder %s9, 1
    %p26 = por %p24, %p25
    %p27 = scmp.ne.s32.totalorder %s19, %s22
    %p28 = scmp.eq.s32.totalorder %s9, 0
    %p29 = por %p27, %p28
    %p30 = scmp.ne.s32.totalorder %s19, %s22
    %p31 = scmp.eq.s32.totalorder %s14, 1
    %p32 = por %p30, %p31
    %p33 = scmp.ne.s32.totalorder %s22, %s23
    %p34 = scmp.eq.s32.totalorder %s14, 0
    %p35 = por %p33, %p34
    %p36 = scmp.ne.s32.totalorder %s22, %s23
    %p37 = scmp.eq.s32.totalorder %s15, 1
    %p38 = por %p36, %p37
    %p40 = scmp.ne.s32.totalorder %s23, %s39
    %p41 = scmp.eq.s32.totalorder %s15, 0
    %p42 = por %p40, %p41
    %s44 = sadd.s32 %s43, 1
    %p47 = scmp.eq.s32.totalorder %s9, 1
    %p48 = scmp.ne.s32.totalorder %s43, %s45
    %p49 = scmp.eq.s32.totalorder %s9, 0
    %p50 = por %p48, %p49
    %p51 = scmp.ne.s32.totalorder %s43, %s45
    %p52 = scmp.eq.s32.totalorder %s14, 1
    %p53 = por %p51, %p52
    %p54 = scmp.ne.s32.totalorder %s45, %s46
    %p55 = scmp.eq.s32.totalorder %s14, 0
    %p56 = por %p54, %p55
    %p57 = scmp.ne.s32.totalorder %s45, %s46
    %p58 = scmp.eq.s32.totalorder %s15, 1
    %p59 = por %p57, %p58
    %p61 = scmp.ne.s32.totalorder %s46, %s60
    %p62 = scmp.eq.s32.totalorder %s15, 0
    %p63 = por %p61, %p62
    %s65 = sadd.s32 %s64, 1
    %p68 = scmp.eq.s32.totalorder %s9, 1
    %p69 = scmp.ne.s32.totalorder %s64, %s66
    %p70 = scmp.eq.s32.totalorder %s9, 0
    %p71 = por %p69, %p70
    %p72 = scmp.ne.s32.totalorder %s64, %s66
    %p73 = scmp.eq.s32.totalorder %s14, 1
    %p74 = por %p72, %p73
    %p75 = scmp.ne.s32.totalorder %s66, %s67
    %p76 = scmp.eq.s32.totalorder %s14, 0
    %p77 = por %p75, %p76
    %p78 = scmp.ne.s32.totalorder %s66, %s67
    %p79 = scmp.eq.s32.totalorder %s15, 1
    %p80 = por %p78, %p79
    %p82 = scmp.ne.s32.totalorder %s67, %s81
    %p83 = scmp.eq.s32.totalorder %s15, 0
    %p84 = por %p82, %p83
    %s85 = ssub.s32 %s9, %s16
    %p86 = scmp.eq.s32.totalorder %s85, 0
    %s88 = sadd.s32 %s87, 1
    %s89 = scalar_select %p86, %s87, %s88
    %p92 = pneg %p86
    %p93 = scmp.eq.s32.totalorder %s9, 1
    %p94 = por %p92, %p93
    %p95 = scmp.ne.s32.totalorder %s87, %s90
    %p96 = scmp.eq.s32.totalorder %s9, 0
    %p97 = por %p95, %p96
    %p98 = scmp.ne.s32.totalorder %s87, %s90
    %p99 = scmp.eq.s32.totalorder %s14, 1
    %p100 = por %p98, %p99
    %p101 = scmp.ne.s32.totalorder %s90, %s91
    %p102 = scmp.eq.s32.totalorder %s14, 0
    %p103 = por %p101, %p102
    %p104 = scmp.ne.s32.totalorder %s90, %s91
    %p105 = scmp.eq.s32.totalorder %s15, 1
    %p106 = por %p104, %p105
    %p108 = scmp.ne.s32.totalorder %s91, %s107
    %p109 = scmp.eq.s32.totalorder %s15, 0
    %p110 = por %p108, %p109
    %p111 = scmp.le.s32.totalorder 1, %s9
    %p112 = scmp.lt.s32.totalorder %s9, 3
    %p113 = pnand %p111, %p112
    %p114 = pneg %p113
    // Predicated region
    $region9: #{tpu_custom_call.1} parent=5 // pred_check
      _
    $region10: #{tpu_custom_call.1} parent=5 // pred_check_branch
      %116 = sbr.rel (%p113) target = $region12
    $region11: #{tpu_custom_call.1} parent=5 // pred_region
      %s117 = ssub.s32 %s9, 1
      // Predicated region
      $region13: #{tpu_custom_call.1} parent=11 // pred_check
        %p118 = pneg %p56
      $region14: #{tpu_custom_call.1} parent=11 // pred_check_branch
        %120 = sbr.rel (%p118) target = $region16
      $region15: #{tpu_custom_call.1} parent=11 // pred_region
        _
      $region16: #{tpu_custom_call.1} parent=11 // pred_fallthru
        _
      // Predicated region
      $region17: #{tpu_custom_call.1} parent=11 // pred_check
        %p121 = pneg %p77
      $region18: #{tpu_custom_call.1} parent=11 // pred_check_branch
        %123 = sbr.rel (%p121) target = $region20
      $region19: #{tpu_custom_call.1} parent=11 // pred_region
        _
      $region20: #{tpu_custom_call.1} parent=11 // pred_fallthru
        _
    $region12: #{tpu_custom_call.1} parent=5 // pred_fallthru
      _
    %p124 = scmp.lt.s32.totalorder %s9, 2
    // Predicated region
    $region21: #{tpu_custom_call.1} parent=5 // pred_check
      %p125 = pneg %p124
    $region22: #{tpu_custom_call.1} parent=5 // pred_check_branch
      %127 = sbr.rel (%p125) target = $region24
    $region23: #{tpu_custom_call.1} parent=5 // pred_region
      // Predicated region
      $region25: #{tpu_custom_call.1} parent=23 // pred_check
        %p128 = pneg %p29
      $region26: #{tpu_custom_call.1} parent=23 // pred_check_branch
        %130 = sbr.rel (%p128) target = $region28
      $region27: #{tpu_custom_call.1} parent=23 // pred_region
        %p131 = scmp.lt.s32.totalorder %s9, 1
        %s132 = scalar_select %p131, %s9, 1
        %s133 = smul.addr %s132, 41
        %s134 = smul.addr %s133, 8
        %s135 = scalar_lea.vmem %s0, %s134
      $region28: #{tpu_custom_call.1} parent=23 // pred_fallthru
        _
    $region24: #{tpu_custom_call.1} parent=5 // pred_fallthru
      _
    %p136 = scmp.le.s32.totalorder 1, %s9
    %p137 = scmp.lt.s32.totalorder %s9, 3
    %p138 = pnand %p136, %p137
    %p139 = pneg %p138
    // Predicated region
    $region29: #{tpu_custom_call.1} parent=5 // pred_check
      _
    $region30: #{tpu_custom_call.1} parent=5 // pred_check_branch
      %141 = sbr.rel (%p138) target = $region32
    $region31: #{tpu_custom_call.1} parent=5 // pred_region
      %s142 = ssub.s32 %s9, 1
      %p143 = scmp.lt.s32.totalorder %s14, 1
      %s144 = scalar_select %p143, %s14, 1
      %s145 = smul.addr %s144, 41
      %s146 = smul.addr %s145, 8
      %s147 = scalar_lea.vmem %s0, %s146
      %p148 = pneg %p35
      %p149 = pneg %p32
      %p150 = pneg %p56
      %p151 = pneg %p53
      %p152 = pneg %p77
      %p153 = pneg %p74
      %p154 = pneg %p103
      %p155 = pneg %p100
      %p156 = scmp.lt.s32.totalorder %s14, 1
      %s157 = scalar_select %p156, %s14, 1
      %s158 = smul.addr %s157, 36
      %s159 = smul.addr %s158, 8
      %s160 = scalar_lea.vmem %s3, %s159
      %p161 = scmp.lt.s32.totalorder %s14, 1
      %s162 = scalar_select %p161, %s14, 1
      %s163 = smul.addr %s162, 41
      %s164 = smul.addr %s163, 8
      %s165 = scalar_lea.vmem %s0, %s164
      %p166 = scmp.lt.s32.totalorder %s14, 1
      %s167 = scalar_select %p166, %s14, 1
      %s168 = smul.addr %s167, 36
      %s169 = smul.addr %s168, 8
      %s170 = scalar_lea.vmem %s3, %s169
      %v172 = vld [vmem:[%s165] sm:$0xff]
      %v173 = vld [vmem:[%s165 + $0x8] sm:$0xff]
      %v174 = vld [vmem:[%s165 + $0x10] sm:$0xff]
      %v175 = vld [vmem:[%s165 + $0x18] sm:$0xff]
      %v176 = vld [vmem:[%s165 + $0x20] sm:$0xff]
      %v177 = vld [vmem:[%s165 + $0x28] sm:$0xff]
      %v178 = vld [vmem:[%s165 + $0x30] sm:$0xff]
      %v179 = vld [vmem:[%s165 + $0x38] sm:$0xff]
      %v180 = vld [vmem:[%s165 + $0x40] sm:$0xff]
      %v181 = vld [vmem:[%s165 + $0x48] sm:$0xff]
      %v182 = vld [vmem:[%s165 + $0x50] sm:$0xff]
      %v183 = vld [vmem:[%s165 + $0x58] sm:$0xff]
      %v184 = vld [vmem:[%s165 + $0x60] sm:$0xff]
      %v185 = vld [vmem:[%s165 + $0x68] sm:$0xff]
      %v186 = vld [vmem:[%s165 + $0x70] sm:$0xff]
      %v187 = vld [vmem:[%s165 + $0x78] sm:$0xff]
      %v188 = vld [vmem:[%s165 + $0x80] sm:$0xff]
      %v189 = vld [vmem:[%s165 + $0x88] sm:$0xff]
      %v190 = vld [vmem:[%s165 + $0x90] sm:$0xff]
      %v191 = vld [vmem:[%s165 + $0x98] sm:$0xff]
      %v192 = vld [vmem:[%s165 + $0xa0] sm:$0xff]
      %v193 = vld [vmem:[%s165 + $0xa8] sm:$0xff]
      %v194 = vld [vmem:[%s165 + $0xb0] sm:$0xff]
      %v195 = vld [vmem:[%s165 + $0xb8] sm:$0xff]
      %v196 = vld [vmem:[%s165 + $0xc0] sm:$0xff]
      %v197 = vld [vmem:[%s165 + $0xc8] sm:$0xff]
      %v198 = vld [vmem:[%s165 + $0xd0] sm:$0xff]
      %v199 = vld [vmem:[%s165 + $0xd8] sm:$0xff]
      %v200 = vld [vmem:[%s165 + $0xe0] sm:$0xff]
      %v201 = vld [vmem:[%s165 + $0xe8] sm:$0xff]
      %v202 = vld [vmem:[%s165 + $0xf0] sm:$0xff]
      %v203 = vld [vmem:[%s165 + $0xf8] sm:$0xff]
      %v204 = vld [vmem:[%s165 + $0x100] sm:$0xff]
      %v205 = vld [vmem:[%s165 + $0x108] sm:$0xff]
      %v206 = vld [vmem:[%s165 + $0x110] sm:$0xff]
      %v207 = vld [vmem:[%s165 + $0x118] sm:$0xff]
      %v208 = vpack.c.bf16 %v173, %v172
      %v209 = vpack.c.bf16 %v175, %v174
      %v210 = vpack.c.bf16 %v177, %v176
      %v211 = vpack.c.bf16 %v179, %v178
      %v212 = vpack.c.bf16 %v181, %v180
      %v213 = vpack.c.bf16 %v183, %v182
      %v214 = vpack.c.bf16 %v185, %v184
      %v215 = vpack.c.bf16 %v187, %v186
      %v216 = vpack.c.bf16 %v189, %v188
      %v217 = vpack.c.bf16 %v191, %v190
      %v218 = vpack.c.bf16 %v193, %v192
      %v219 = vpack.c.bf16 %v195, %v194
      %v220 = vpack.c.bf16 %v197, %v196
      %v221 = vpack.c.bf16 %v199, %v198
      %v222 = vpack.c.bf16 %v201, %v200
      %v223 = vpack.c.bf16 %v203, %v202
      %v224 = vpack.c.bf16 %v205, %v204
      %v225 = vpack.c.bf16 %v207, %v206
      %v226 = vld [vmem:[%s1] sm:$0x3]
      %v227 = vld [vmem:[%s165 + $0x1] sm:$0xff]
      %v228 = vld [vmem:[%s165 + $0x9] sm:$0xff]
      %v229 = vld [vmem:[%s165 + $0x11] sm:$0xff]
      %v230 = vld [vmem:[%s165 + $0x19] sm:$0xff]
      %v231 = vld [vmem:[%s165 + $0x21] sm:$0xff]
      %v232 = vld [vmem:[%s165 + $0x29] sm:$0xff]
      %v233 = vld [vmem:[%s165 + $0x31] sm:$0xff]
      %v234 = vld [vmem:[%s165 + $0x39] sm:$0xff]
      %v235 = vld [vmem:[%s165 + $0x41] sm:$0xff]
      %v236 = vld [vmem:[%s165 + $0x49] sm:$0xff]
      %v237 = vld [vmem:[%s165 + $0x51] sm:$0xff]
      %v238 = vld [vmem:[%s165 + $0x59] sm:$0xff]
      %v239 = vld [vmem:[%s165 + $0x61] sm:$0xff]
      %v240 = vld [vmem:[%s165 + $0x69] sm:$0xff]
      %v241 = vld [vmem:[%s165 + $0x71] sm:$0xff]
      %v242 = vld [vmem:[%s165 + $0x79] sm:$0xff]
      %v243 = vld [vmem:[%s165 + $0x81] sm:$0xff]
      %v244 = vld [vmem:[%s165 + $0x89] sm:$0xff]
      %v245 = vld [vmem:[%s165 + $0x91] sm:$0xff]
      %v246 = vld [vmem:[%s165 + $0x99] sm:$0xff]
      %v247 = vld [vmem:[%s165 + $0xa1] sm:$0xff]
      %v248 = vld [vmem:[%s165 + $0xa9] sm:$0xff]
      %v249 = vld [vmem:[%s165 + $0xb1] sm:$0xff]
      %v250 = vld [vmem:[%s165 + $0xb9] sm:$0xff]
      %v251 = vld [vmem:[%s165 + $0xc1] sm:$0xff]
      %v252 = vld [vmem:[%s165 + $0xc9] sm:$0xff]
      %v253 = vld [vmem:[%s165 + $0xd1] sm:$0xff]
      %v254 = vld [vmem:[%s165 + $0xd9] sm:$0xff]
      %v255 = vld [vmem:[%s165 + $0xe1] sm:$0xff]
      %v256 = vld [vmem:[%s165 + $0xe9] sm:$0xff]
      %v257 = vld [vmem:[%s165 + $0xf1] sm:$0xff]
      %v258 = vld [vmem:[%s165 + $0xf9] sm:$0xff]
      %v259 = vld [vmem:[%s165 + $0x101] sm:$0xff]
      %v260 = vld [vmem:[%s165 + $0x109] sm:$0xff]
      %v261 = vld [vmem:[%s165 + $0x111] sm:$0xff]
      %v262 = vld [vmem:[%s165 + $0x119] sm:$0xff]
      %v263 = vpack.c.bf16 %v228, %v227
      %v264 = vpack.c.bf16 %v230, %v229
      %v265 = vpack.c.bf16 %v232, %v231
      %v266 = vpack.c.bf16 %v234, %v233
      %v267 = vpack.c.bf16 %v236, %v235
      %v268 = vpack.c.bf16 %v238, %v237
      %v269 = vpack.c.bf16 %v240, %v239
      %v270 = vpack.c.bf16 %v242, %v241
      %v271 = vpack.c.bf16 %v244, %v243
      %v272 = vpack.c.bf16 %v246, %v245
      %v273 = vpack.c.bf16 %v248, %v247
      %v274 = vpack.c.bf16 %v250, %v249
      %v275 = vpack.c.bf16 %v252, %v251
      %v276 = vpack.c.bf16 %v254, %v253
      %v277 = vpack.c.bf16 %v256, %v255
      %v278 = vpack.c.bf16 %v258, %v257
      %v279 = vpack.c.bf16 %v260, %v259
      %v280 = vpack.c.bf16 %v262, %v261
      %s281 = scalar_lea.vmem %s1, 2
      %v282 = vld [vmem:[%s281] sm:$0x3]
      %vm283 = vcmask 31744
      %v285 = vsel %vm283, %v263, 0
      %v288 = vsel %vm283, %v264, 0
      %v291 = vsel %vm283, %v265, 0
      %v294 = vsel %vm283, %v266, 0
      %v297 = vsel %vm283, %v267, 0
      %v300 = vsel %vm283, %v268, 0
      %v303 = vsel %vm283, %v269, 0
      %v306 = vsel %vm283, %v270, 0
      %v309 = vsel %vm283, %v271, 0
      %v312 = vsel %vm283, %v272, 0
      %v315 = vsel %vm283, %v273, 0
      %v318 = vsel %vm283, %v274, 0
      %v321 = vsel %vm283, %v275, 0
      %v324 = vsel %vm283, %v276, 0
      %v327 = vsel %vm283, %v277, 0
      %v330 = vsel %vm283, %v278, 0
      %v333 = vsel %vm283, %v279, 0
      %v336 = vsel %vm283, %v280, 0
      %vm338 = vcmask 1041408
      %v340 = vsel %vm338, %v282, 0
      %342 = vmatpush.bf16.msra.mxu0 0
      %343 = vmatpush.bf16.msra.mxu0 0
      %344 = vmatpush.bf16.msra.mxu0 0
      %345 = vmatpush.bf16.msra.mxu0 0
      %346 = vmatpush.bf16.msra.mxu0 0
      %347 = vmatpush.bf16.msra.mxu0 0
      %348 = vmatpush.bf16.msra.mxu0 0
      %349 = vmatpush.bf16.msra.mxu0 %v340
      %350 = vmatmul.bf16.gmra.mxu0 %v285
      %v351 = vpop.f32.mrf.mxu0
      %v352 = vadd.f32 0.0, %v351
      %v353 = vpop.f32.mrf.mxu0
      %v354 = vadd.f32 0.0, %v353
      %355 = vmatmul.bf16.gmra.mxu0 %v288
      %v356 = vpop.f32.mrf.mxu0
      %v357 = vadd.f32 0.0, %v356
      %v358 = vpop.f32.mrf.mxu0
      %v359 = vadd.f32 0.0, %v358
      %360 = vmatmul.bf16.gmra.mxu0 %v291
      %v361 = vpop.f32.mrf.mxu0
      %v362 = vadd.f32 0.0, %v361
      %v363 = vpop.f32.mrf.mxu0
      %v364 = vadd.f32 0.0, %v363
      %365 = vmatmul.bf16.gmra.mxu0 %v294
      %v366 = vpop.f32.mrf.mxu0
      %v367 = vadd.f32 0.0, %v366
      %v368 = vpop.f32.mrf.mxu0
      %v369 = vadd.f32 0.0, %v368
      %370 = vmatmul.bf16.gmra.mxu0 %v297
      %v371 = vpop.f32.mrf.mxu0
      %v372 = vadd.f32 0.0, %v371
      %v373 = vpop.f32.mrf.mxu0
      %v374 = vadd.f32 0.0, %v373
      %375 = vmatmul.bf16.gmra.mxu0 %v300
      %v376 = vpop.f32.mrf.mxu0
      %v377 = vadd.f32 0.0, %v376
      %v378 = vpop.f32.mrf.mxu0
      %v379 = vadd.f32 0.0, %v378
      %380 = vmatmul.bf16.gmra.mxu0 %v303
      %v381 = vpop.f32.mrf.mxu0
      %v382 = vadd.f32 0.0, %v381
      %v383 = vpop.f32.mrf.mxu0
      %v384 = vadd.f32 0.0, %v383
      %385 = vmatmul.bf16.gmra.mxu0 %v306
      %v386 = vpop.f32.mrf.mxu0
      %v387 = vadd.f32 0.0, %v386
      %v388 = vpop.f32.mrf.mxu0
      %v389 = vadd.f32 0.0, %v388
      %390 = vmatmul.bf16.gmra.mxu0 %v309
      %v391 = vpop.f32.mrf.mxu0
      %v392 = vadd.f32 0.0, %v391
      %v393 = vpop.f32.mrf.mxu0
      %v394 = vadd.f32 0.0, %v393
      %395 = vmatmul.bf16.gmra.mxu0 %v312
      %v396 = vpop.f32.mrf.mxu0
      %v397 = vadd.f32 0.0, %v396
      %v398 = vpop.f32.mrf.mxu0
      %v399 = vadd.f32 0.0, %v398
      %400 = vmatmul.bf16.gmra.mxu0 %v315
      %v401 = vpop.f32.mrf.mxu0
      %v402 = vadd.f32 0.0, %v401
      %v403 = vpop.f32.mrf.mxu0
      %v404 = vadd.f32 0.0, %v403
      %405 = vmatmul.bf16.gmra.mxu0 %v318
      %v406 = vpop.f32.mrf.mxu0
      %v407 = vadd.f32 0.0, %v406
      %v408 = vpop.f32.mrf.mxu0
      %v409 = vadd.f32 0.0, %v408
      %410 = vmatmul.bf16.gmra.mxu0 %v321
      %v411 = vpop.f32.mrf.mxu0
      %v412 = vadd.f32 0.0, %v411
      %v413 = vpop.f32.mrf.mxu0
      %v414 = vadd.f32 0.0, %v413
      %415 = vmatmul.bf16.gmra.mxu0 %v324
      %v416 = vpop.f32.mrf.mxu0
      %v417 = vadd.f32 0.0, %v416
      %v418 = vpop.f32.mrf.mxu0
      %v419 = vadd.f32 0.0, %v418
      %420 = vmatmul.bf16.gmra.mxu0 %v327
      %v421 = vpop.f32.mrf.mxu0
      %v422 = vadd.f32 0.0, %v421
      %v423 = vpop.f32.mrf.mxu0
      %v424 = vadd.f32 0.0, %v423
      %425 = vmatmul.bf16.gmra.mxu0 %v330
      %v426 = vpop.f32.mrf.mxu0
      %v427 = vadd.f32 0.0, %v426
      %v428 = vpop.f32.mrf.mxu0
      %v429 = vadd.f32 0.0, %v428
      %430 = vmatmul.bf16.gmra.mxu0 %v333
      %v431 = vpop.f32.mrf.mxu0
      %v432 = vadd.f32 0.0, %v431
      %v433 = vpop.f32.mrf.mxu0
      %v434 = vadd.f32 0.0, %v433
      %435 = vmatmul.bf16.gmra.mxu0 %v336
      %v436 = vpop.f32.mrf.mxu0
      %v437 = vadd.f32 0.0, %v436
      %v438 = vpop.f32.mrf.mxu0
      %v439 = vadd.f32 0.0, %v438
      %440 = vdwg.mxu0
      %v442 = vsel %vm283, %v208, 0
      %v445 = vsel %vm283, %v209, 0
      %v448 = vsel %vm283, %v210, 0
      %v451 = vsel %vm283, %v211, 0
      %v454 = vsel %vm283, %v212, 0
      %v457 = vsel %vm283, %v213, 0
      %v460 = vsel %vm283, %v214, 0
      %v463 = vsel %vm283, %v215, 0
      %v466 = vsel %vm283, %v216, 0
      %v469 = vsel %vm283, %v217, 0
      %v472 = vsel %vm283, %v218, 0
      %v475 = vsel %vm283, %v219, 0
      %v478 = vsel %vm283, %v220, 0
      %v481 = vsel %vm283, %v221, 0
      %v484 = vsel %vm283, %v222, 0
      %v487 = vsel %vm283, %v223, 0
      %v490 = vsel %vm283, %v224, 0
      %v493 = vsel %vm283, %v225, 0
      %v496 = vsel %vm338, %v226, 0
      %498 = vmatpush.bf16.msra.mxu0 0
      %499 = vmatpush.bf16.msra.mxu0 0
      %500 = vmatpush.bf16.msra.mxu0 0
      %501 = vmatpush.bf16.msra.mxu0 0
      %502 = vmatpush.bf16.msra.mxu0 0
      %503 = vmatpush.bf16.msra.mxu0 0
      %504 = vmatpush.bf16.msra.mxu0 0
      %505 = vmatpush.bf16.msra.mxu0 %v496
      %506 = vmatmul.bf16.gmra.mxu0 %v442
      %v507 = vpop.f32.mrf.mxu0
      %v508 = vadd.f32 %v352, %v507
      %v509 = vpop.f32.mrf.mxu0
      %v510 = vadd.f32 %v354, %v509
      %511 = vmatmul.bf16.gmra.mxu0 %v445
      %v512 = vpop.f32.mrf.mxu0
      %v513 = vadd.f32 %v357, %v512
      %v514 = vpop.f32.mrf.mxu0
      %v515 = vadd.f32 %v359, %v514
      %516 = vmatmul.bf16.gmra.mxu0 %v448
      %v517 = vpop.f32.mrf.mxu0
      %v518 = vadd.f32 %v362, %v517
      %v519 = vpop.f32.mrf.mxu0
      %v520 = vadd.f32 %v364, %v519
      %521 = vmatmul.bf16.gmra.mxu0 %v451
      %v522 = vpop.f32.mrf.mxu0
      %v523 = vadd.f32 %v367, %v522
      %v524 = vpop.f32.mrf.mxu0
      %v525 = vadd.f32 %v369, %v524
      %526 = vmatmul.bf16.gmra.mxu0 %v454
      %v527 = vpop.f32.mrf.mxu0
      %v528 = vadd.f32 %v372, %v527
      %v529 = vpop.f32.mrf.mxu0
      %v530 = vadd.f32 %v374, %v529
      %531 = vmatmul.bf16.gmra.mxu0 %v457
      %v532 = vpop.f32.mrf.mxu0
      %v533 = vadd.f32 %v377, %v532
      %v534 = vpop.f32.mrf.mxu0
      %v535 = vadd.f32 %v379, %v534
      %536 = vmatmul.bf16.gmra.mxu0 %v460
      %v537 = vpop.f32.mrf.mxu0
      %v538 = vadd.f32 %v382, %v537
      %v539 = vpop.f32.mrf.mxu0
      %v540 = vadd.f32 %v384, %v539
      %541 = vmatmul.bf16.gmra.mxu0 %v463
      %v542 = vpop.f32.mrf.mxu0
      %v543 = vadd.f32 %v387, %v542
      %v544 = vpop.f32.mrf.mxu0
      %v545 = vadd.f32 %v389, %v544
      %546 = vmatmul.bf16.gmra.mxu0 %v466
      %v547 = vpop.f32.mrf.mxu0
      %v548 = vadd.f32 %v392, %v547
      %v549 = vpop.f32.mrf.mxu0
      %v550 = vadd.f32 %v394, %v549
      %551 = vmatmul.bf16.gmra.mxu0 %v469
      %v552 = vpop.f32.mrf.mxu0
      %v553 = vadd.f32 %v397, %v552
      %v554 = vpop.f32.mrf.mxu0
      %v555 = vadd.f32 %v399, %v554
      %556 = vmatmul.bf16.gmra.mxu0 %v472
      %v557 = vpop.f32.mrf.mxu0
      %v558 = vadd.f32 %v402, %v557
      %v559 = vpop.f32.mrf.mxu0
      %v560 = vadd.f32 %v404, %v559
      %561 = vmatmul.bf16.gmra.mxu0 %v475
      %v562 = vpop.f32.mrf.mxu0
      %v563 = vadd.f32 %v407, %v562
      %v564 = vpop.f32.mrf.mxu0
      %v565 = vadd.f32 %v409, %v564
      %566 = vmatmul.bf16.gmra.mxu0 %v478
      %v567 = vpop.f32.mrf.mxu0
      %v568 = vadd.f32 %v412, %v567
      %v569 = vpop.f32.mrf.mxu0
      %v570 = vadd.f32 %v414, %v569
      %571 = vmatmul.bf16.gmra.mxu0 %v481
      %v572 = vpop.f32.mrf.mxu0
      %v573 = vadd.f32 %v417, %v572
      %v574 = vpop.f32.mrf.mxu0
      %v575 = vadd.f32 %v419, %v574
      %576 = vmatmul.bf16.gmra.mxu0 %v484
      %v577 = vpop.f32.mrf.mxu0
      %v578 = vadd.f32 %v422, %v577
      %v579 = vpop.f32.mrf.mxu0
      %v580 = vadd.f32 %v424, %v579
      %581 = vmatmul.bf16.gmra.mxu0 %v487
      %v582 = vpop.f32.mrf.mxu0
      %v583 = vadd.f32 %v427, %v582
      %v584 = vpop.f32.mrf.mxu0
      %v585 = vadd.f32 %v429, %v584
      %586 = vmatmul.bf16.gmra.mxu0 %v490
      %v587 = vpop.f32.mrf.mxu0
      %v588 = vadd.f32 %v432, %v587
      %v589 = vpop.f32.mrf.mxu0
      %v590 = vadd.f32 %v434, %v589
      %591 = vmatmul.bf16.gmra.mxu0 %v493
      %v592 = vpop.f32.mrf.mxu0
      %v593 = vadd.f32 %v437, %v592
      %v594 = vpop.f32.mrf.mxu0
      %v595 = vadd.f32 %v439, %v594
      %596 = vdwg.mxu0
      %v597 = vld [vmem:[%s165 + $0x2] sm:$0xff]
      %v598 = vld [vmem:[%s165 + $0xa] sm:$0xff]
      %v599 = vld [vmem:[%s165 + $0x12] sm:$0xff]
      %v600 = vld [vmem:[%s165 + $0x1a] sm:$0xff]
      %v601 = vld [vmem:[%s165 + $0x22] sm:$0xff]
      %v602 = vld [vmem:[%s165 + $0x2a] sm:$0xff]
      %v603 = vld [vmem:[%s165 + $0x32] sm:$0xff]
      %v604 = vld [vmem:[%s165 + $0x3a] sm:$0xff]
      %v605 = vld [vmem:[%s165 + $0x42] sm:$0xff]
      %v606 = vld [vmem:[%s165 + $0x4a] sm:$0xff]
      %v607 = vld [vmem:[%s165 + $0x52] sm:$0xff]
      %v608 = vld [vmem:[%s165 + $0x5a] sm:$0xff]
      %v609 = vld [vmem:[%s165 + $0x62] sm:$0xff]
      %v610 = vld [vmem:[%s165 + $0x6a] sm:$0xff]
      %v611 = vld [vmem:[%s165 + $0x72] sm:$0xff]
      %v612 = vld [vmem:[%s165 + $0x7a] sm:$0xff]
      %v613 = vld [vmem:[%s165 + $0x82] sm:$0xff]
      %v614 = vld [vmem:[%s165 + $0x8a] sm:$0xff]
      %v615 = vld [vmem:[%s165 + $0x92] sm:$0xff]
      %v616 = vld [vmem:[%s165 + $0x9a] sm:$0xff]
      %v617 = vld [vmem:[%s165 + $0xa2] sm:$0xff]
      %v618 = vld [vmem:[%s165 + $0xaa] sm:$0xff]
      %v619 = vld [vmem:[%s165 + $0xb2] sm:$0xff]
      %v620 = vld [vmem:[%s165 + $0xba] sm:$0xff]
      %v621 = vld [vmem:[%s165 + $0xc2] sm:$0xff]
      %v622 = vld [vmem:[%s165 + $0xca] sm:$0xff]
      %v623 = vld [vmem:[%s165 + $0xd2] sm:$0xff]
      %v624 = vld [vmem:[%s165 + $0xda] sm:$0xff]
      %v625 = vld [vmem:[%s165 + $0xe2] sm:$0xff]
      %v626 = vld [vmem:[%s165 + $0xea] sm:$0xff]
      %v627 = vld [vmem:[%s165 + $0xf2] sm:$0xff]
      %v628 = vld [vmem:[%s165 + $0xfa] sm:$0xff]
      %v629 = vld [vmem:[%s165 + $0x102] sm:$0xff]
      %v630 = vld [vmem:[%s165 + $0x10a] sm:$0xff]
      %v631 = vld [vmem:[%s165 + $0x112] sm:$0xff]
      %v632 = vld [vmem:[%s165 + $0x11a] sm:$0xff]
      %v633 = vpack.c.bf16 %v598, %v597
      %v634 = vpack.c.bf16 %v600, %v599
      %v635 = vpack.c.bf16 %v602, %v601
      %v636 = vpack.c.bf16 %v604, %v603
      %v637 = vpack.c.bf16 %v606, %v605
      %v638 = vpack.c.bf16 %v608, %v607
      %v639 = vpack.c.bf16 %v610, %v609
      %v640 = vpack.c.bf16 %v612, %v611
      %v641 = vpack.c.bf16 %v614, %v613
      %v642 = vpack.c.bf16 %v616, %v615
      %v643 = vpack.c.bf16 %v618, %v617
      %v644 = vpack.c.bf16 %v620, %v619
      %v645 = vpack.c.bf16 %v622, %v621
      %v646 = vpack.c.bf16 %v624, %v623
      %v647 = vpack.c.bf16 %v626, %v625
      %v648 = vpack.c.bf16 %v628, %v627
      %v649 = vpack.c.bf16 %v630, %v629
      %v650 = vpack.c.bf16 %v632, %v631
      %s651 = scalar_lea.vmem %s1, 4
      %v652 = vld [vmem:[%s651] sm:$0x3]
      %v654 = vsel %vm283, %v633, 0
      %v657 = vsel %vm283, %v634, 0
      %v660 = vsel %vm283, %v635, 0
      %v663 = vsel %vm283, %v636, 0
      %v666 = vsel %vm283, %v637, 0
      %v669 = vsel %vm283, %v638, 0
      %v672 = vsel %vm283, %v639, 0
      %v675 = vsel %vm283, %v640, 0
      %v678 = vsel %vm283, %v641, 0
      %v681 = vsel %vm283, %v642, 0
      %v684 = vsel %vm283, %v643, 0
      %v687 = vsel %vm283, %v644, 0
      %v690 = vsel %vm283, %v645, 0
      %v693 = vsel %vm283, %v646, 0
      %v696 = vsel %vm283, %v647, 0
      %v699 = vsel %vm283, %v648, 0
      %v702 = vsel %vm283, %v649, 0
      %v705 = vsel %vm283, %v650, 0
      %v708 = vsel %vm338, %v652, 0
      %710 = vmatpush.bf16.msra.mxu0 0
      %711 = vmatpush.bf16.msra.mxu0 0
      %712 = vmatpush.bf16.msra.mxu0 0
      %713 = vmatpush.bf16.msra.mxu0 0
      %714 = vmatpush.bf16.msra.mxu0 0
      %715 = vmatpush.bf16.msra.mxu0 0
      %716 = vmatpush.bf16.msra.mxu0 0
      %717 = vmatpush.bf16.msra.mxu0 %v708
      %718 = vmatmul.bf16.gmra.mxu0 %v654
      %v719 = vpop.f32.mrf.mxu0
      %v720 = vadd.f32 0.0, %v719
      %v721 = vpop.f32.mrf.mxu0
      %v722 = vadd.f32 0.0, %v721
      %723 = vmatmul.bf16.gmra.mxu0 %v657
      %v724 = vpop.f32.mrf.mxu0
      %v725 = vadd.f32 0.0, %v724
      %v726 = vpop.f32.mrf.mxu0
      %v727 = vadd.f32 0.0, %v726
      %728 = vmatmul.bf16.gmra.mxu0 %v660
      %v729 = vpop.f32.mrf.mxu0
      %v730 = vadd.f32 0.0, %v729
      %v731 = vpop.f32.mrf.mxu0
      %v732 = vadd.f32 0.0, %v731
      %733 = vmatmul.bf16.gmra.mxu0 %v663
      %v734 = vpop.f32.mrf.mxu0
      %v735 = vadd.f32 0.0, %v734
      %v736 = vpop.f32.mrf.mxu0
      %v737 = vadd.f32 0.0, %v736
      %738 = vmatmul.bf16.gmra.mxu0 %v666
      %v739 = vpop.f32.mrf.mxu0
      %v740 = vadd.f32 0.0, %v739
      %v741 = vpop.f32.mrf.mxu0
      %v742 = vadd.f32 0.0, %v741
      %743 = vmatmul.bf16.gmra.mxu0 %v669
      %v744 = vpop.f32.mrf.mxu0
      %v745 = vadd.f32 0.0, %v744
      %v746 = vpop.f32.mrf.mxu0
      %v747 = vadd.f32 0.0, %v746
      %748 = vmatmul.bf16.gmra.mxu0 %v672
      %v749 = vpop.f32.mrf.mxu0
      %v750 = vadd.f32 0.0, %v749
      %v751 = vpop.f32.mrf.mxu0
      %v752 = vadd.f32 0.0, %v751
      %753 = vmatmul.bf16.gmra.mxu0 %v675
      %v754 = vpop.f32.mrf.mxu0
      %v755 = vadd.f32 0.0, %v754
      %v756 = vpop.f32.mrf.mxu0
      %v757 = vadd.f32 0.0, %v756
      %758 = vmatmul.bf16.gmra.mxu0 %v678
      %v759 = vpop.f32.mrf.mxu0
      %v760 = vadd.f32 0.0, %v759
      %v761 = vpop.f32.mrf.mxu0
      %v762 = vadd.f32 0.0, %v761
      %763 = vmatmul.bf16.gmra.mxu0 %v681
      %v764 = vpop.f32.mrf.mxu0
      %v765 = vadd.f32 0.0, %v764
      %v766 = vpop.f32.mrf.mxu0
      %v767 = vadd.f32 0.0, %v766
      %768 = vmatmul.bf16.gmra.mxu0 %v684
      %v769 = vpop.f32.mrf.mxu0
      %v770 = vadd.f32 0.0, %v769
      %v771 = vpop.f32.mrf.mxu0
      %v772 = vadd.f32 0.0, %v771
      %773 = vmatmul.bf16.gmra.mxu0 %v687
      %v774 = vpop.f32.mrf.mxu0
      %v775 = vadd.f32 0.0, %v774
      %v776 = vpop.f32.mrf.mxu0
      %v777 = vadd.f32 0.0, %v776
      %778 = vmatmul.bf16.gmra.mxu0 %v690
      %v779 = vpop.f32.mrf.mxu0
      %v780 = vadd.f32 0.0, %v779
      %v781 = vpop.f32.mrf.mxu0
      %v782 = vadd.f32 0.0, %v781
      %783 = vmatmul.bf16.gmra.mxu0 %v693
      %v784 = vpop.f32.mrf.mxu0
      %v785 = vadd.f32 0.0, %v784
      %v786 = vpop.f32.mrf.mxu0
      %v787 = vadd.f32 0.0, %v786
      %788 = vmatmul.bf16.gmra.mxu0 %v696
      %v789 = vpop.f32.mrf.mxu0
      %v790 = vadd.f32 0.0, %v789
      %v791 = vpop.f32.mrf.mxu0
      %v792 = vadd.f32 0.0, %v791
      %793 = vmatmul.bf16.gmra.mxu0 %v699
      %v794 = vpop.f32.mrf.mxu0
      %v795 = vadd.f32 0.0, %v794
      %v796 = vpop.f32.mrf.mxu0
      %v797 = vadd.f32 0.0, %v796
      %798 = vmatmul.bf16.gmra.mxu0 %v702
      %v799 = vpop.f32.mrf.mxu0
      %v800 = vadd.f32 0.0, %v799
      %v801 = vpop.f32.mrf.mxu0
      %v802 = vadd.f32 0.0, %v801
      %803 = vmatmul.bf16.gmra.mxu0 %v705
      %v804 = vpop.f32.mrf.mxu0
      %v805 = vadd.f32 0.0, %v804
      %v806 = vpop.f32.mrf.mxu0
      %v807 = vadd.f32 0.0, %v806
      %808 = vdwg.mxu0
      %v809 = vadd.f32 %v508, %v720
      %v810 = vadd.f32 %v510, %v722
      %v811 = vadd.f32 %v513, %v725
      %v812 = vadd.f32 %v515, %v727
      %v813 = vadd.f32 %v518, %v730
      %v814 = vadd.f32 %v520, %v732
      %v815 = vadd.f32 %v523, %v735
      %v816 = vadd.f32 %v525, %v737
      %v817 = vadd.f32 %v528, %v740
      %v818 = vadd.f32 %v530, %v742
      %v819 = vadd.f32 %v533, %v745
      %v820 = vadd.f32 %v535, %v747
      %v821 = vadd.f32 %v538, %v750
      %v822 = vadd.f32 %v540, %v752
      %v823 = vadd.f32 %v543, %v755
      %v824 = vadd.f32 %v545, %v757
      %v825 = vadd.f32 %v548, %v760
      %v826 = vadd.f32 %v550, %v762
      %v827 = vadd.f32 %v553, %v765
      %v828 = vadd.f32 %v555, %v767
      %v829 = vadd.f32 %v558, %v770
      %v830 = vadd.f32 %v560, %v772
      %v831 = vadd.f32 %v563, %v775
      %v832 = vadd.f32 %v565, %v777
      %v833 = vadd.f32 %v568, %v780
      %v834 = vadd.f32 %v570, %v782
      %v835 = vadd.f32 %v573, %v785
      %v836 = vadd.f32 %v575, %v787
      %v837 = vadd.f32 %v578, %v790
      %v838 = vadd.f32 %v580, %v792
      %v839 = vadd.f32 %v583, %v795
      %v840 = vadd.f32 %v585, %v797
      %v841 = vadd.f32 %v588, %v800
      %v842 = vadd.f32 %v590, %v802
      %v843 = vadd.f32 %v593, %v805
      %v844 = vadd.f32 %v595, %v807
      %v845 = vld [vmem:[%s165 + $0x12] sm:$0xff]
      %v846 = vld [vmem:[%s165 + $0x1a] sm:$0xff]
      %v847 = vld [vmem:[%s165 + $0x22] sm:$0xff]
      %v848 = vld [vmem:[%s165 + $0x2a] sm:$0xff]
      %v849 = vld [vmem:[%s165 + $0x32] sm:$0xff]
      %v850 = vld [vmem:[%s165 + $0x3a] sm:$0xff]
      %v851 = vld [vmem:[%s165 + $0x42] sm:$0xff]
      %v852 = vld [vmem:[%s165 + $0x4a] sm:$0xff]
      %v853 = vld [vmem:[%s165 + $0x52] sm:$0xff]
      %v854 = vld [vmem:[%s165 + $0x5a] sm:$0xff]
      %v855 = vld [vmem:[%s165 + $0x62] sm:$0xff]
      %v856 = vld [vmem:[%s165 + $0x6a] sm:$0xff]
      %v857 = vld [vmem:[%s165 + $0x72] sm:$0xff]
      %v858 = vld [vmem:[%s165 + $0x7a] sm:$0xff]
      %v859 = vld [vmem:[%s165 + $0x82] sm:$0xff]
      %v860 = vld [vmem:[%s165 + $0x8a] sm:$0xff]
      %v861 = vld [vmem:[%s165 + $0x92] sm:$0xff]
      %v862 = vld [vmem:[%s165 + $0x9a] sm:$0xff]
      %v863 = vld [vmem:[%s165 + $0xa2] sm:$0xff]
      %v864 = vld [vmem:[%s165 + $0xaa] sm:$0xff]
      %v865 = vld [vmem:[%s165 + $0xb2] sm:$0xff]
      %v866 = vld [vmem:[%s165 + $0xba] sm:$0xff]
      %v867 = vld [vmem:[%s165 + $0xc2] sm:$0xff]
      %v868 = vld [vmem:[%s165 + $0xca] sm:$0xff]
      %v869 = vld [vmem:[%s165 + $0xd2] sm:$0xff]
      %v870 = vld [vmem:[%s165 + $0xda] sm:$0xff]
      %v871 = vld [vmem:[%s165 + $0xe2] sm:$0xff]
      %v872 = vld [vmem:[%s165 + $0xea] sm:$0xff]
      %v873 = vld [vmem:[%s165 + $0xf2] sm:$0xff]
      %v874 = vld [vmem:[%s165 + $0xfa] sm:$0xff]
      %v875 = vld [vmem:[%s165 + $0x102] sm:$0xff]
      %v876 = vld [vmem:[%s165 + $0x10a] sm:$0xff]
      %v877 = vld [vmem:[%s165 + $0x112] sm:$0xff]
      %v878 = vld [vmem:[%s165 + $0x11a] sm:$0xff]
      %v879 = vld [vmem:[%s165 + $0x122] sm:$0xff]
      %v880 = vld [vmem:[%s165 + $0x12a] sm:$0xff]
      %v881 = vpack.c.bf16 %v846, %v845
      %v882 = vpack.c.bf16 %v848, %v847
      %v883 = vpack.c.bf16 %v850, %v849
      %v884 = vpack.c.bf16 %v852, %v851
      %v885 = vpack.c.bf16 %v854, %v853
      %v886 = vpack.c.bf16 %v856, %v855
      %v887 = vpack.c.bf16 %v858, %v857
      %v888 = vpack.c.bf16 %v860, %v859
      %v889 = vpack.c.bf16 %v862, %v861
      %v890 = vpack.c.bf16 %v864, %v863
      %v891 = vpack.c.bf16 %v866, %v865
      %v892 = vpack.c.bf16 %v868, %v867
      %v893 = vpack.c.bf16 %v870, %v869
      %v894 = vpack.c.bf16 %v872, %v871
      %v895 = vpack.c.bf16 %v874, %v873
      %v896 = vpack.c.bf16 %v876, %v875
      %v897 = vpack.c.bf16 %v878, %v877
      %v898 = vpack.c.bf16 %v880, %v879
      %s899 = scalar_lea.vmem %s1, 6
      %v900 = vld [vmem:[%s899] sm:$0x3]
      %v902 = vsel %vm283, %v881, 0
      %v905 = vsel %vm283, %v882, 0
      %v908 = vsel %vm283, %v883, 0
      %v911 = vsel %vm283, %v884, 0
      %v914 = vsel %vm283, %v885, 0
      %v917 = vsel %vm283, %v886, 0
      %v920 = vsel %vm283, %v887, 0
      %v923 = vsel %vm283, %v888, 0
      %v926 = vsel %vm283, %v889, 0
      %v929 = vsel %vm283, %v890, 0
      %v932 = vsel %vm283, %v891, 0
      %v935 = vsel %vm283, %v892, 0
      %v938 = vsel %vm283, %v893, 0
      %v941 = vsel %vm283, %v894, 0
      %v944 = vsel %vm283, %v895, 0
      %v947 = vsel %vm283, %v896, 0
      %v950 = vsel %vm283, %v897, 0
      %v953 = vsel %vm283, %v898, 0
      %v956 = vsel %vm338, %v900, 0
      %958 = vmatpush.bf16.msra.mxu0 0
      %959 = vmatpush.bf16.msra.mxu0 0
      %960 = vmatpush.bf16.msra.mxu0 0
      %961 = vmatpush.bf16.msra.mxu0 0
      %962 = vmatpush.bf16.msra.mxu0 0
      %963 = vmatpush.bf16.msra.mxu0 0
      %964 = vmatpush.bf16.msra.mxu0 0
      %965 = vmatpush.bf16.msra.mxu0 %v956
      %966 = vmatmul.bf16.gmra.mxu0 %v902
      %v967 = vpop.f32.mrf.mxu0
      %v968 = vadd.f32 0.0, %v967
      %v969 = vpop.f32.mrf.mxu0
      %v970 = vadd.f32 0.0, %v969
      %971 = vmatmul.bf16.gmra.mxu0 %v905
      %v972 = vpop.f32.mrf.mxu0
      %v973 = vadd.f32 0.0, %v972
      %v974 = vpop.f32.mrf.mxu0
      %v975 = vadd.f32 0.0, %v974
      %976 = vmatmul.bf16.gmra.mxu0 %v908
      %v977 = vpop.f32.mrf.mxu0
      %v978 = vadd.f32 0.0, %v977
      %v979 = vpop.f32.mrf.mxu0
      %v980 = vadd.f32 0.0, %v979
      %981 = vmatmul.bf16.gmra.mxu0 %v911
      %v982 = vpop.f32.mrf.mxu0
      %v983 = vadd.f32 0.0, %v982
      %v984 = vpop.f32.mrf.mxu0
      %v985 = vadd.f32 0.0, %v984
      %986 = vmatmul.bf16.gmra.mxu0 %v914
      %v987 = vpop.f32.mrf.mxu0
      %v988 = vadd.f32 0.0, %v987
      %v989 = vpop.f32.mrf.mxu0
      %v990 = vadd.f32 0.0, %v989
      %991 = vmatmul.bf16.gmra.mxu0 %v917
      %v992 = vpop.f32.mrf.mxu0
      %v993 = vadd.f32 0.0, %v992
      %v994 = vpop.f32.mrf.mxu0
      %v995 = vadd.f32 0.0, %v994
      %996 = vmatmul.bf16.gmra.mxu0 %v920
      %v997 = vpop.f32.mrf.mxu0
      %v998 = vadd.f32 0.0, %v997
      %v999 = vpop.f32.mrf.mxu0
      %v1000 = vadd.f32 0.0, %v999
      %1001 = vmatmul.bf16.gmra.mxu0 %v923
      %v1002 = vpop.f32.mrf.mxu0
      %v1003 = vadd.f32 0.0, %v1002
      %v1004 = vpop.f32.mrf.mxu0
      %v1005 = vadd.f32 0.0, %v1004
      %1006 = vmatmul.bf16.gmra.mxu0 %v926
      %v1007 = vpop.f32.mrf.mxu0
      %v1008 = vadd.f32 0.0, %v1007
      %v1009 = vpop.f32.mrf.mxu0
      %v1010 = vadd.f32 0.0, %v1009
      %1011 = vmatmul.bf16.gmra.mxu0 %v929
      %v1012 = vpop.f32.mrf.mxu0
      %v1013 = vadd.f32 0.0, %v1012
      %v1014 = vpop.f32.mrf.mxu0
      %v1015 = vadd.f32 0.0, %v1014
      %1016 = vmatmul.bf16.gmra.mxu0 %v932
      %v1017 = vpop.f32.mrf.mxu0
      %v1018 = vadd.f32 0.0, %v1017
      %v1019 = vpop.f32.mrf.mxu0
      %v1020 = vadd.f32 0.0, %v1019
      %1021 = vmatmul.bf16.gmra.mxu0 %v935
      %v1022 = vpop.f32.mrf.mxu0
      %v1023 = vadd.f32 0.0, %v1022
      %v1024 = vpop.f32.mrf.mxu0
      %v1025 = vadd.f32 0.0, %v1024
      %1026 = vmatmul.bf16.gmra.mxu0 %v938
      %v1027 = vpop.f32.mrf.mxu0
      %v1028 = vadd.f32 0.0, %v1027
      %v1029 = vpop.f32.mrf.mxu0
      %v1030 = vadd.f32 0.0, %v1029
      %1031 = vmatmul.bf16.gmra.mxu0 %v941
      %v1032 = vpop.f32.mrf.mxu0
      %v1033 = vadd.f32 0.0, %v1032
      %v1034 = vpop.f32.mrf.mxu0
      %v1035 = vadd.f32 0.0, %v1034
      %1036 = vmatmul.bf16.gmra.mxu0 %v944
      %v1037 = vpop.f32.mrf.mxu0
      %v1038 = vadd.f32 0.0, %v1037
      %v1039 = vpop.f32.mrf.mxu0
      %v1040 = vadd.f32 0.0, %v1039
      %1041 = vmatmul.bf16.gmra.mxu0 %v947
      %v1042 = vpop.f32.mrf.mxu0
      %v1043 = vadd.f32 0.0, %v1042
      %v1044 = vpop.f32.mrf.mxu0
      %v1045 = vadd.f32 0.0, %v1044
      %1046 = vmatmul.bf16.gmra.mxu0 %v950
      %v1047 = vpop.f32.mrf.mxu0
      %v1048 = vadd.f32 0.0, %v1047
      %v1049 = vpop.f32.mrf.mxu0
      %v1050 = vadd.f32 0.0, %v1049
      %1051 = vmatmul.bf16.gmra.mxu0 %v953
      %v1052 = vpop.f32.mrf.mxu0
      %v1053 = vadd.f32 0.0, %v1052
      %v1054 = vpop.f32.mrf.mxu0
      %v1055 = vadd.f32 0.0, %v1054
      %1056 = vdwg.mxu0
      %v1057 = vadd.f32 %v809, %v968
      %v1058 = vadd.f32 %v810, %v970
      %v1059 = vadd.f32 %v811, %v973
      %v1060 = vadd.f32 %v812, %v975
      %v1061 = vadd.f32 %v813, %v978
      %v1062 = vadd.f32 %v814, %v980
      %v1063 = vadd.f32 %v815, %v983
      %v1064 = vadd.f32 %v816, %v985
      %v1065 = vadd.f32 %v817, %v988
      %v1066 = vadd.f32 %v818, %v990
      %v1067 = vadd.f32 %v819, %v993
      %v1068 = vadd.f32 %v820, %v995
      %v1069 = vadd.f32 %v821, %v998
      %v1070 = vadd.f32 %v822, %v1000
      %v1071 = vadd.f32 %v823, %v1003
      %v1072 = vadd.f32 %v824, %v1005
      %v1073 = vadd.f32 %v825, %v1008
      %v1074 = vadd.f32 %v826, %v1010
      %v1075 = vadd.f32 %v827, %v1013
      %v1076 = vadd.f32 %v828, %v1015
      %v1077 = vadd.f32 %v829, %v1018
      %v1078 = vadd.f32 %v830, %v1020
      %v1079 = vadd.f32 %v831, %v1023
      %v1080 = vadd.f32 %v832, %v1025
      %v1081 = vadd.f32 %v833, %v1028
      %v1082 = vadd.f32 %v834, %v1030
      %v1083 = vadd.f32 %v835, %v1033
      %v1084 = vadd.f32 %v836, %v1035
      %v1085 = vadd.f32 %v837, %v1038
      %v1086 = vadd.f32 %v838, %v1040
      %v1087 = vadd.f32 %v839, %v1043
      %v1088 = vadd.f32 %v840, %v1045
      %v1089 = vadd.f32 %v841, %v1048
      %v1090 = vadd.f32 %v842, %v1050
      %v1091 = vadd.f32 %v843, %v1053
      %v1092 = vadd.f32 %v844, %v1055
      %v1093 = vld [vmem:[%s165 + $0x13] sm:$0xff]
      %v1094 = vld [vmem:[%s165 + $0x1b] sm:$0xff]
      %v1095 = vld [vmem:[%s165 + $0x23] sm:$0xff]
      %v1096 = vld [vmem:[%s165 + $0x2b] sm:$0xff]
      %v1097 = vld [vmem:[%s165 + $0x33] sm:$0xff]
      %v1098 = vld [vmem:[%s165 + $0x3b] sm:$0xff]
      %v1099 = vld [vmem:[%s165 + $0x43] sm:$0xff]
      %v1100 = vld [vmem:[%s165 + $0x4b] sm:$0xff]
      %v1101 = vld [vmem:[%s165 + $0x53] sm:$0xff]
      %v1102 = vld [vmem:[%s165 + $0x5b] sm:$0xff]
      %v1103 = vld [vmem:[%s165 + $0x63] sm:$0xff]
      %v1104 = vld [vmem:[%s165 + $0x6b] sm:$0xff]
      %v1105 = vld [vmem:[%s165 + $0x73] sm:$0xff]
      %v1106 = vld [vmem:[%s165 + $0x7b] sm:$0xff]
      %v1107 = vld [vmem:[%s165 + $0x83] sm:$0xff]
      %v1108 = vld [vmem:[%s165 + $0x8b] sm:$0xff]
      %v1109 = vld [vmem:[%s165 + $0x93] sm:$0xff]
      %v1110 = vld [vmem:[%s165 + $0x9b] sm:$0xff]
      %v1111 = vld [vmem:[%s165 + $0xa3] sm:$0xff]
      %v1112 = vld [vmem:[%s165 + $0xab] sm:$0xff]
      %v1113 = vld [vmem:[%s165 + $0xb3] sm:$0xff]
      %v1114 = vld [vmem:[%s165 + $0xbb] sm:$0xff]
      %v1115 = vld [vmem:[%s165 + $0xc3] sm:$0xff]
      %v1116 = vld [vmem:[%s165 + $0xcb] sm:$0xff]
      %v1117 = vld [vmem:[%s165 + $0xd3] sm:$0xff]
      %v1118 = vld [vmem:[%s165 + $0xdb] sm:$0xff]
      %v1119 = vld [vmem:[%s165 + $0xe3] sm:$0xff]
      %v1120 = vld [vmem:[%s165 + $0xeb] sm:$0xff]
      %v1121 = vld [vmem:[%s165 + $0xf3] sm:$0xff]
      %v1122 = vld [vmem:[%s165 + $0xfb] sm:$0xff]
      %v1123 = vld [vmem:[%s165 + $0x103] sm:$0xff]
      %v1124 = vld [vmem:[%s165 + $0x10b] sm:$0xff]
      %v1125 = vld [vmem:[%s165 + $0x113] sm:$0xff]
      %v1126 = vld [vmem:[%s165 + $0x11b] sm:$0xff]
      %v1127 = vld [vmem:[%s165 + $0x123] sm:$0xff]
      %v1128 = vld [vmem:[%s165 + $0x12b] sm:$0xff]
      %v1129 = vpack.c.bf16 %v1094, %v1093
      %v1130 = vpack.c.bf16 %v1096, %v1095
      %v1131 = vpack.c.bf16 %v1098, %v1097
      %v1132 = vpack.c.bf16 %v1100, %v1099
      %v1133 = vpack.c.bf16 %v1102, %v1101
      %v1134 = vpack.c.bf16 %v1104, %v1103
      %v1135 = vpack.c.bf16 %v1106, %v1105
      %v1136 = vpack.c.bf16 %v1108, %v1107
      %v1137 = vpack.c.bf16 %v1110, %v1109
      %v1138 = vpack.c.bf16 %v1112, %v1111
      %v1139 = vpack.c.bf16 %v1114, %v1113
      %v1140 = vpack.c.bf16 %v1116, %v1115
      %v1141 = vpack.c.bf16 %v1118, %v1117
      %v1142 = vpack.c.bf16 %v1120, %v1119
      %v1143 = vpack.c.bf16 %v1122, %v1121
      %v1144 = vpack.c.bf16 %v1124, %v1123
      %v1145 = vpack.c.bf16 %v1126, %v1125
      %v1146 = vpack.c.bf16 %v1128, %v1127
      %s1147 = scalar_lea.vmem %s1, 8
      %v1148 = vld [vmem:[%s1147] sm:$0x3]
      %v1150 = vsel %vm283, %v1129, 0
      %v1153 = vsel %vm283, %v1130, 0
      %v1156 = vsel %vm283, %v1131, 0
      %v1159 = vsel %vm283, %v1132, 0
      %v1162 = vsel %vm283, %v1133, 0
      %v1165 = vsel %vm283, %v1134, 0
      %v1168 = vsel %vm283, %v1135, 0
      %v1171 = vsel %vm283, %v1136, 0
      %v1174 = vsel %vm283, %v1137, 0
      %v1177 = vsel %vm283, %v1138, 0
      %v1180 = vsel %vm283, %v1139, 0
      %v1183 = vsel %vm283, %v1140, 0
      %v1186 = vsel %vm283, %v1141, 0
      %v1189 = vsel %vm283, %v1142, 0
      %v1192 = vsel %vm283, %v1143, 0
      %v1195 = vsel %vm283, %v1144, 0
      %v1198 = vsel %vm283, %v1145, 0
      %v1201 = vsel %vm283, %v1146, 0
      %v1204 = vsel %vm338, %v1148, 0
      %1206 = vmatpush.bf16.msra.mxu0 0
      %1207 = vmatpush.bf16.msra.mxu0 0
      %1208 = vmatpush.bf16.msra.mxu0 0
      %1209 = vmatpush.bf16.msra.mxu0 0
      %1210 = vmatpush.bf16.msra.mxu0 0
      %1211 = vmatpush.bf16.msra.mxu0 0
      %1212 = vmatpush.bf16.msra.mxu0 0
      %1213 = vmatpush.bf16.msra.mxu0 %v1204
      %1214 = vmatmul.bf16.gmra.mxu0 %v1150
      %v1215 = vpop.f32.mrf.mxu0
      %v1216 = vadd.f32 0.0, %v1215
      %v1217 = vpop.f32.mrf.mxu0
      %v1218 = vadd.f32 0.0, %v1217
      %1219 = vmatmul.bf16.gmra.mxu0 %v1153
      %v1220 = vpop.f32.mrf.mxu0
      %v1221 = vadd.f32 0.0, %v1220
      %v1222 = vpop.f32.mrf.mxu0
      %v1223 = vadd.f32 0.0, %v1222
      %1224 = vmatmul.bf16.gmra.mxu0 %v1156
      %v1225 = vpop.f32.mrf.mxu0
      %v1226 = vadd.f32 0.0, %v1225
      %v1227 = vpop.f32.mrf.mxu0
      %v1228 = vadd.f32 0.0, %v1227
      %1229 = vmatmul.bf16.gmra.mxu0 %v1159
      %v1230 = vpop.f32.mrf.mxu0
      %v1231 = vadd.f32 0.0, %v1230
      %v1232 = vpop.f32.mrf.mxu0
      %v1233 = vadd.f32 0.0, %v1232
      %1234 = vmatmul.bf16.gmra.mxu0 %v1162
      %v1235 = vpop.f32.mrf.mxu0
      %v1236 = vadd.f32 0.0, %v1235
      %v1237 = vpop.f32.mrf.mxu0
      %v1238 = vadd.f32 0.0, %v1237
      %1239 = vmatmul.bf16.gmra.mxu0 %v1165
      %v1240 = vpop.f32.mrf.mxu0
      %v1241 = vadd.f32 0.0, %v1240
      %v1242 = vpop.f32.mrf.mxu0
      %v1243 = vadd.f32 0.0, %v1242
      %1244 = vmatmul.bf16.gmra.mxu0 %v1168
      %v1245 = vpop.f32.mrf.mxu0
      %v1246 = vadd.f32 0.0, %v1245
      %v1247 = vpop.f32.mrf.mxu0
      %v1248 = vadd.f32 0.0, %v1247
      %1249 = vmatmul.bf16.gmra.mxu0 %v1171
      %v1250 = vpop.f32.mrf.mxu0
      %v1251 = vadd.f32 0.0, %v1250
      %v1252 = vpop.f32.mrf.mxu0
      %v1253 = vadd.f32 0.0, %v1252
      %1254 = vmatmul.bf16.gmra.mxu0 %v1174
      %v1255 = vpop.f32.mrf.mxu0
      %v1256 = vadd.f32 0.0, %v1255
      %v1257 = vpop.f32.mrf.mxu0
      %v1258 = vadd.f32 0.0, %v1257
      %1259 = vmatmul.bf16.gmra.mxu0 %v1177
      %v1260 = vpop.f32.mrf.mxu0
      %v1261 = vadd.f32 0.0, %v1260
      %v1262 = vpop.f32.mrf.mxu0
      %v1263 = vadd.f32 0.0, %v1262
      %1264 = vmatmul.bf16.gmra.mxu0 %v1180
      %v1265 = vpop.f32.mrf.mxu0
      %v1266 = vadd.f32 0.0, %v1265
      %v1267 = vpop.f32.mrf.mxu0
      %v1268 = vadd.f32 0.0, %v1267
      %1269 = vmatmul.bf16.gmra.mxu0 %v1183
      %v1270 = vpop.f32.mrf.mxu0
      %v1271 = vadd.f32 0.0, %v1270
      %v1272 = vpop.f32.mrf.mxu0
      %v1273 = vadd.f32 0.0, %v1272
      %1274 = vmatmul.bf16.gmra.mxu0 %v1186
      %v1275 = vpop.f32.mrf.mxu0
      %v1276 = vadd.f32 0.0, %v1275
      %v1277 = vpop.f32.mrf.mxu0
      %v1278 = vadd.f32 0.0, %v1277
      %1279 = vmatmul.bf16.gmra.mxu0 %v1189
      %v1280 = vpop.f32.mrf.mxu0
      %v1281 = vadd.f32 0.0, %v1280
      %v1282 = vpop.f32.mrf.mxu0
      %v1283 = vadd.f32 0.0, %v1282
      %1284 = vmatmul.bf16.gmra.mxu0 %v1192
      %v1285 = vpop.f32.mrf.mxu0
      %v1286 = vadd.f32 0.0, %v1285
      %v1287 = vpop.f32.mrf.mxu0
      %v1288 = vadd.f32 0.0, %v1287
      %1289 = vmatmul.bf16.gmra.mxu0 %v1195
      %v1290 = vpop.f32.mrf.mxu0
      %v1291 = vadd.f32 0.0, %v1290
      %v1292 = vpop.f32.mrf.mxu0
      %v1293 = vadd.f32 0.0, %v1292
      %1294 = vmatmul.bf16.gmra.mxu0 %v1198
      %v1295 = vpop.f32.mrf.mxu0
      %v1296 = vadd.f32 0.0, %v1295
      %v1297 = vpop.f32.mrf.mxu0
      %v1298 = vadd.f32 0.0, %v1297
      %1299 = vmatmul.bf16.gmra.mxu0 %v1201
      %v1300 = vpop.f32.mrf.mxu0
      %v1301 = vadd.f32 0.0, %v1300
      %v1302 = vpop.f32.mrf.mxu0
      %v1303 = vadd.f32 0.0, %v1302
      %1304 = vdwg.mxu0
      %v1305 = vadd.f32 %v1057, %v1216
      %v1306 = vadd.f32 %v1058, %v1218
      %v1307 = vadd.f32 %v1059, %v1221
      %v1308 = vadd.f32 %v1060, %v1223
      %v1309 = vadd.f32 %v1061, %v1226
      %v1310 = vadd.f32 %v1062, %v1228
      %v1311 = vadd.f32 %v1063, %v1231
      %v1312 = vadd.f32 %v1064, %v1233
      %v1313 = vadd.f32 %v1065, %v1236
      %v1314 = vadd.f32 %v1066, %v1238
      %v1315 = vadd.f32 %v1067, %v1241
      %v1316 = vadd.f32 %v1068, %v1243
      %v1317 = vadd.f32 %v1069, %v1246
      %v1318 = vadd.f32 %v1070, %v1248
      %v1319 = vadd.f32 %v1071, %v1251
      %v1320 = vadd.f32 %v1072, %v1253
      %v1321 = vadd.f32 %v1073, %v1256
      %v1322 = vadd.f32 %v1074, %v1258
      %v1323 = vadd.f32 %v1075, %v1261
      %v1324 = vadd.f32 %v1076, %v1263
      %v1325 = vadd.f32 %v1077, %v1266
      %v1326 = vadd.f32 %v1078, %v1268
      %v1327 = vadd.f32 %v1079, %v1271
      %v1328 = vadd.f32 %v1080, %v1273
      %v1329 = vadd.f32 %v1081, %v1276
      %v1330 = vadd.f32 %v1082, %v1278
      %v1331 = vadd.f32 %v1083, %v1281
      %v1332 = vadd.f32 %v1084, %v1283
      %v1333 = vadd.f32 %v1085, %v1286
      %v1334 = vadd.f32 %v1086, %v1288
      %v1335 = vadd.f32 %v1087, %v1291
      %v1336 = vadd.f32 %v1088, %v1293
      %v1337 = vadd.f32 %v1089, %v1296
      %v1338 = vadd.f32 %v1090, %v1298
      %v1339 = vadd.f32 %v1091, %v1301
      %v1340 = vadd.f32 %v1092, %v1303
      %v1341 = vld [vmem:[%s165 + $0x14] sm:$0xff]
      %v1342 = vld [vmem:[%s165 + $0x1c] sm:$0xff]
      %v1343 = vld [vmem:[%s165 + $0x24] sm:$0xff]
      %v1344 = vld [vmem:[%s165 + $0x2c] sm:$0xff]
      %v1345 = vld [vmem:[%s165 + $0x34] sm:$0xff]
      %v1346 = vld [vmem:[%s165 + $0x3c] sm:$0xff]
      %v1347 = vld [vmem:[%s165 + $0x44] sm:$0xff]
      %v1348 = vld [vmem:[%s165 + $0x4c] sm:$0xff]
      %v1349 = vld [vmem:[%s165 + $0x54] sm:$0xff]
      %v1350 = vld [vmem:[%s165 + $0x5c] sm:$0xff]
      %v1351 = vld [vmem:[%s165 + $0x64] sm:$0xff]
      %v1352 = vld [vmem:[%s165 + $0x6c] sm:$0xff]
      %v1353 = vld [vmem:[%s165 + $0x74] sm:$0xff]
      %v1354 = vld [vmem:[%s165 + $0x7c] sm:$0xff]
      %v1355 = vld [vmem:[%s165 + $0x84] sm:$0xff]
      %v1356 = vld [vmem:[%s165 + $0x8c] sm:$0xff]
      %v1357 = vld [vmem:[%s165 + $0x94] sm:$0xff]
      %v1358 = vld [vmem:[%s165 + $0x9c] sm:$0xff]
      %v1359 = vld [vmem:[%s165 + $0xa4] sm:$0xff]
      %v1360 = vld [vmem:[%s165 + $0xac] sm:$0xff]
      %v1361 = vld [vmem:[%s165 + $0xb4] sm:$0xff]
      %v1362 = vld [vmem:[%s165 + $0xbc] sm:$0xff]
      %v1363 = vld [vmem:[%s165 + $0xc4] sm:$0xff]
      %v1364 = vld [vmem:[%s165 + $0xcc] sm:$0xff]
      %v1365 = vld [vmem:[%s165 + $0xd4] sm:$0xff]
      %v1366 = vld [vmem:[%s165 + $0xdc] sm:$0xff]
      %v1367 = vld [vmem:[%s165 + $0xe4] sm:$0xff]
      %v1368 = vld [vmem:[%s165 + $0xec] sm:$0xff]
      %v1369 = vld [vmem:[%s165 + $0xf4] sm:$0xff]
      %v1370 = vld [vmem:[%s165 + $0xfc] sm:$0xff]
      %v1371 = vld [vmem:[%s165 + $0x104] sm:$0xff]
      %v1372 = vld [vmem:[%s165 + $0x10c] sm:$0xff]
      %v1373 = vld [vmem:[%s165 + $0x114] sm:$0xff]
      %v1374 = vld [vmem:[%s165 + $0x11c] sm:$0xff]
      %v1375 = vld [vmem:[%s165 + $0x124] sm:$0xff]
      %v1376 = vld [vmem:[%s165 + $0x12c] sm:$0xff]
      %v1377 = vpack.c.bf16 %v1342, %v1341
      %v1378 = vpack.c.bf16 %v1344, %v1343
      %v1379 = vpack.c.bf16 %v1346, %v1345
      %v1380 = vpack.c.bf16 %v1348, %v1347
      %v1381 = vpack.c.bf16 %v1350, %v1349
      %v1382 = vpack.c.bf16 %v1352, %v1351
      %v1383 = vpack.c.bf16 %v1354, %v1353
      %v1384 = vpack.c.bf16 %v1356, %v1355
      %v1385 = vpack.c.bf16 %v1358, %v1357
      %v1386 = vpack.c.bf16 %v1360, %v1359
      %v1387 = vpack.c.bf16 %v1362, %v1361
      %v1388 = vpack.c.bf16 %v1364, %v1363
      %v1389 = vpack.c.bf16 %v1366, %v1365
      %v1390 = vpack.c.bf16 %v1368, %v1367
      %v1391 = vpack.c.bf16 %v1370, %v1369
      %v1392 = vpack.c.bf16 %v1372, %v1371
      %v1393 = vpack.c.bf16 %v1374, %v1373
      %v1394 = vpack.c.bf16 %v1376, %v1375
      %s1395 = scalar_lea.vmem %s1, 10
      %v1396 = vld [vmem:[%s1395] sm:$0x3]
      %v1398 = vsel %vm283, %v1377, 0
      %v1401 = vsel %vm283, %v1378, 0
      %v1404 = vsel %vm283, %v1379, 0
      %v1407 = vsel %vm283, %v1380, 0
      %v1410 = vsel %vm283, %v1381, 0
      %v1413 = vsel %vm283, %v1382, 0
      %v1416 = vsel %vm283, %v1383, 0
      %v1419 = vsel %vm283, %v1384, 0
      %v1422 = vsel %vm283, %v1385, 0
      %v1425 = vsel %vm283, %v1386, 0
      %v1428 = vsel %vm283, %v1387, 0
      %v1431 = vsel %vm283, %v1388, 0
      %v1434 = vsel %vm283, %v1389, 0
      %v1437 = vsel %vm283, %v1390, 0
      %v1440 = vsel %vm283, %v1391, 0
      %v1443 = vsel %vm283, %v1392, 0
      %v1446 = vsel %vm283, %v1393, 0
      %v1449 = vsel %vm283, %v1394, 0
      %v1452 = vsel %vm338, %v1396, 0
      %1454 = vmatpush.bf16.msra.mxu0 0
      %1455 = vmatpush.bf16.msra.mxu0 0
      %1456 = vmatpush.bf16.msra.mxu0 0
      %1457 = vmatpush.bf16.msra.mxu0 0
      %1458 = vmatpush.bf16.msra.mxu0 0
      %1459 = vmatpush.bf16.msra.mxu0 0
      %1460 = vmatpush.bf16.msra.mxu0 0
      %1461 = vmatpush.bf16.msra.mxu0 %v1452
      %1462 = vmatmul.bf16.gmra.mxu0 %v1398
      %v1463 = vpop.f32.mrf.mxu0
      %v1464 = vadd.f32 0.0, %v1463
      %v1465 = vpop.f32.mrf.mxu0
      %v1466 = vadd.f32 0.0, %v1465
      %1467 = vmatmul.bf16.gmra.mxu0 %v1401
      %v1468 = vpop.f32.mrf.mxu0
      %v1469 = vadd.f32 0.0, %v1468
      %v1470 = vpop.f32.mrf.mxu0
      %v1471 = vadd.f32 0.0, %v1470
      %1472 = vmatmul.bf16.gmra.mxu0 %v1404
      %v1473 = vpop.f32.mrf.mxu0
      %v1474 = vadd.f32 0.0, %v1473
      %v1475 = vpop.f32.mrf.mxu0
      %v1476 = vadd.f32 0.0, %v1475
      %1477 = vmatmul.bf16.gmra.mxu0 %v1407
      %v1478 = vpop.f32.mrf.mxu0
      %v1479 = vadd.f32 0.0, %v1478
      %v1480 = vpop.f32.mrf.mxu0
      %v1481 = vadd.f32 0.0, %v1480
      %1482 = vmatmul.bf16.gmra.mxu0 %v1410
      %v1483 = vpop.f32.mrf.mxu0
      %v1484 = vadd.f32 0.0, %v1483
      %v1485 = vpop.f32.mrf.mxu0
      %v1486 = vadd.f32 0.0, %v1485
      %1487 = vmatmul.bf16.gmra.mxu0 %v1413
      %v1488 = vpop.f32.mrf.mxu0
      %v1489 = vadd.f32 0.0, %v1488
      %v1490 = vpop.f32.mrf.mxu0
      %v1491 = vadd.f32 0.0, %v1490
      %1492 = vmatmul.bf16.gmra.mxu0 %v1416
      %v1493 = vpop.f32.mrf.mxu0
      %v1494 = vadd.f32 0.0, %v1493
      %v1495 = vpop.f32.mrf.mxu0
      %v1496 = vadd.f32 0.0, %v1495
      %1497 = vmatmul.bf16.gmra.mxu0 %v1419
      %v1498 = vpop.f32.mrf.mxu0
      %v1499 = vadd.f32 0.0, %v1498
      %v1500 = vpop.f32.mrf.mxu0
      %v1501 = vadd.f32 0.0, %v1500
      %1502 = vmatmul.bf16.gmra.mxu0 %v1422
      %v1503 = vpop.f32.mrf.mxu0
      %v1504 = vadd.f32 0.0, %v1503
      %v1505 = vpop.f32.mrf.mxu0
      %v1506 = vadd.f32 0.0, %v1505
      %1507 = vmatmul.bf16.gmra.mxu0 %v1425
      %v1508 = vpop.f32.mrf.mxu0
      %v1509 = vadd.f32 0.0, %v1508
      %v1510 = vpop.f32.mrf.mxu0
      %v1511 = vadd.f32 0.0, %v1510
      %1512 = vmatmul.bf16.gmra.mxu0 %v1428
      %v1513 = vpop.f32.mrf.mxu0
      %v1514 = vadd.f32 0.0, %v1513
      %v1515 = vpop.f32.mrf.mxu0
      %v1516 = vadd.f32 0.0, %v1515
      %1517 = vmatmul.bf16.gmra.mxu0 %v1431
      %v1518 = vpop.f32.mrf.mxu0
      %v1519 = vadd.f32 0.0, %v1518
      %v1520 = vpop.f32.mrf.mxu0
      %v1521 = vadd.f32 0.0, %v1520
      %1522 = vmatmul.bf16.gmra.mxu0 %v1434
      %v1523 = vpop.f32.mrf.mxu0
      %v1524 = vadd.f32 0.0, %v1523
      %v1525 = vpop.f32.mrf.mxu0
      %v1526 = vadd.f32 0.0, %v1525
      %1527 = vmatmul.bf16.gmra.mxu0 %v1437
      %v1528 = vpop.f32.mrf.mxu0
      %v1529 = vadd.f32 0.0, %v1528
      %v1530 = vpop.f32.mrf.mxu0
      %v1531 = vadd.f32 0.0, %v1530
      %1532 = vmatmul.bf16.gmra.mxu0 %v1440
      %v1533 = vpop.f32.mrf.mxu0
      %v1534 = vadd.f32 0.0, %v1533
      %v1535 = vpop.f32.mrf.mxu0
      %v1536 = vadd.f32 0.0, %v1535
      %1537 = vmatmul.bf16.gmra.mxu0 %v1443
      %v1538 = vpop.f32.mrf.mxu0
      %v1539 = vadd.f32 0.0, %v1538
      %v1540 = vpop.f32.mrf.mxu0
      %v1541 = vadd.f32 0.0, %v1540
      %1542 = vmatmul.bf16.gmra.mxu0 %v1446
      %v1543 = vpop.f32.mrf.mxu0
      %v1544 = vadd.f32 0.0, %v1543
      %v1545 = vpop.f32.mrf.mxu0
      %v1546 = vadd.f32 0.0, %v1545
      %1547 = vmatmul.bf16.gmra.mxu0 %v1449
      %v1548 = vpop.f32.mrf.mxu0
      %v1549 = vadd.f32 0.0, %v1548
      %v1550 = vpop.f32.mrf.mxu0
      %v1551 = vadd.f32 0.0, %v1550
      %1552 = vdwg.mxu0
      %v1553 = vadd.f32 %v1305, %v1464
      %v1554 = vadd.f32 %v1306, %v1466
      %v1555 = vadd.f32 %v1307, %v1469
      %v1556 = vadd.f32 %v1308, %v1471
      %v1557 = vadd.f32 %v1309, %v1474
      %v1558 = vadd.f32 %v1310, %v1476
      %v1559 = vadd.f32 %v1311, %v1479
      %v1560 = vadd.f32 %v1312, %v1481
      %v1561 = vadd.f32 %v1313, %v1484
      %v1562 = vadd.f32 %v1314, %v1486
      %v1563 = vadd.f32 %v1315, %v1489
      %v1564 = vadd.f32 %v1316, %v1491
      %v1565 = vadd.f32 %v1317, %v1494
      %v1566 = vadd.f32 %v1318, %v1496
      %v1567 = vadd.f32 %v1319, %v1499
      %v1568 = vadd.f32 %v1320, %v1501
      %v1569 = vadd.f32 %v1321, %v1504
      %v1570 = vadd.f32 %v1322, %v1506
      %v1571 = vadd.f32 %v1323, %v1509
      %v1572 = vadd.f32 %v1324, %v1511
      %v1573 = vadd.f32 %v1325, %v1514
      %v1574 = vadd.f32 %v1326, %v1516
      %v1575 = vadd.f32 %v1327, %v1519
      %v1576 = vadd.f32 %v1328, %v1521
      %v1577 = vadd.f32 %v1329, %v1524
      %v1578 = vadd.f32 %v1330, %v1526
      %v1579 = vadd.f32 %v1331, %v1529
      %v1580 = vadd.f32 %v1332, %v1531
      %v1581 = vadd.f32 %v1333, %v1534
      %v1582 = vadd.f32 %v1334, %v1536
      %v1583 = vadd.f32 %v1335, %v1539
      %v1584 = vadd.f32 %v1336, %v1541
      %v1585 = vadd.f32 %v1337, %v1544
      %v1586 = vadd.f32 %v1338, %v1546
      %v1587 = vadd.f32 %v1339, %v1549
      %v1588 = vadd.f32 %v1340, %v1551
      %v1589 = vld [vmem:[%s165 + $0x24] sm:$0xff]
      %v1590 = vld [vmem:[%s165 + $0x2c] sm:$0xff]
      %v1591 = vld [vmem:[%s165 + $0x34] sm:$0xff]
      %v1592 = vld [vmem:[%s165 + $0x3c] sm:$0xff]
      %v1593 = vld [vmem:[%s165 + $0x44] sm:$0xff]
      %v1594 = vld [vmem:[%s165 + $0x4c] sm:$0xff]
      %v1595 = vld [vmem:[%s165 + $0x54] sm:$0xff]
      %v1596 = vld [vmem:[%s165 + $0x5c] sm:$0xff]
      %v1597 = vld [vmem:[%s165 + $0x64] sm:$0xff]
      %v1598 = vld [vmem:[%s165 + $0x6c] sm:$0xff]
      %v1599 = vld [vmem:[%s165 + $0x74] sm:$0xff]
      %v1600 = vld [vmem:[%s165 + $0x7c] sm:$0xff]
      %v1601 = vld [vmem:[%s165 + $0x84] sm:$0xff]
      %v1602 = vld [vmem:[%s165 + $0x8c] sm:$0xff]
      %v1603 = vld [vmem:[%s165 + $0x94] sm:$0xff]
      %v1604 = vld [vmem:[%s165 + $0x9c] sm:$0xff]
      %v1605 = vld [vmem:[%s165 + $0xa4] sm:$0xff]
      %v1606 = vld [vmem:[%s165 + $0xac] sm:$0xff]
      %v1607 = vld [vmem:[%s165 + $0xb4] sm:$0xff]
      %v1608 = vld [vmem:[%s165 + $0xbc] sm:$0xff]
      %v1609 = vld [vmem:[%s165 + $0xc4] sm:$0xff]
      %v1610 = vld [vmem:[%s165 + $0xcc] sm:$0xff]
      %v1611 = vld [vmem:[%s165 + $0xd4] sm:$0xff]
      %v1612 = vld [vmem:[%s165 + $0xdc] sm:$0xff]
      %v1613 = vld [vmem:[%s165 + $0xe4] sm:$0xff]
      %v1614 = vld [vmem:[%s165 + $0xec] sm:$0xff]
      %v1615 = vld [vmem:[%s165 + $0xf4] sm:$0xff]
      %v1616 = vld [vmem:[%s165 + $0xfc] sm:$0xff]
      %v1617 = vld [vmem:[%s165 + $0x104] sm:$0xff]
      %v1618 = vld [vmem:[%s165 + $0x10c] sm:$0xff]
      %v1619 = vld [vmem:[%s165 + $0x114] sm:$0xff]
      %v1620 = vld [vmem:[%s165 + $0x11c] sm:$0xff]
      %v1621 = vld [vmem:[%s165 + $0x124] sm:$0xff]
      %v1622 = vld [vmem:[%s165 + $0x12c] sm:$0xff]
      %v1623 = vld [vmem:[%s165 + $0x134] sm:$0xff]
      %v1624 = vld [vmem:[%s165 + $0x13c] sm:$0xff]
      %v1625 = vpack.c.bf16 %v1590, %v1589
      %v1626 = vpack.c.bf16 %v1592, %v1591
      %v1627 = vpack.c.bf16 %v1594, %v1593
      %v1628 = vpack.c.bf16 %v1596, %v1595
      %v1629 = vpack.c.bf16 %v1598, %v1597
      %v1630 = vpack.c.bf16 %v1600, %v1599
      %v1631 = vpack.c.bf16 %v1602, %v1601
      %v1632 = vpack.c.bf16 %v1604, %v1603
      %v1633 = vpack.c.bf16 %v1606, %v1605
      %v1634 = vpack.c.bf16 %v1608, %v1607
      %v1635 = vpack.c.bf16 %v1610, %v1609
      %v1636 = vpack.c.bf16 %v1612, %v1611
      %v1637 = vpack.c.bf16 %v1614, %v1613
      %v1638 = vpack.c.bf16 %v1616, %v1615
      %v1639 = vpack.c.bf16 %v1618, %v1617
      %v1640 = vpack.c.bf16 %v1620, %v1619
      %v1641 = vpack.c.bf16 %v1622, %v1621
      %v1642 = vpack.c.bf16 %v1624, %v1623
      %s1643 = scalar_lea.vmem %s1, 12
      %v1644 = vld [vmem:[%s1643] sm:$0x3]
      %v1646 = vsel %vm283, %v1625, 0
      %v1649 = vsel %vm283, %v1626, 0
      %v1652 = vsel %vm283, %v1627, 0
      %v1655 = vsel %vm283, %v1628, 0
      %v1658 = vsel %vm283, %v1629, 0
      %v1661 = vsel %vm283, %v1630, 0
      %v1664 = vsel %vm283, %v1631, 0
      %v1667 = vsel %vm283, %v1632, 0
      %v1670 = vsel %vm283, %v1633, 0
      %v1673 = vsel %vm283, %v1634, 0
      %v1676 = vsel %vm283, %v1635, 0
      %v1679 = vsel %vm283, %v1636, 0
      %v1682 = vsel %vm283, %v1637, 0
      %v1685 = vsel %vm283, %v1638, 0
      %v1688 = vsel %vm283, %v1639, 0
      %v1691 = vsel %vm283, %v1640, 0
      %v1694 = vsel %vm283, %v1641, 0
      %v1697 = vsel %vm283, %v1642, 0
      %v1700 = vsel %vm338, %v1644, 0
      %1702 = vmatpush.bf16.msra.mxu0 0
      %1703 = vmatpush.bf16.msra.mxu0 0
      %1704 = vmatpush.bf16.msra.mxu0 0
      %1705 = vmatpush.bf16.msra.mxu0 0
      %1706 = vmatpush.bf16.msra.mxu0 0
      %1707 = vmatpush.bf16.msra.mxu0 0
      %1708 = vmatpush.bf16.msra.mxu0 0
      %1709 = vmatpush.bf16.msra.mxu0 %v1700
      %1710 = vmatmul.bf16.gmra.mxu0 %v1646
      %v1711 = vpop.f32.mrf.mxu0
      %v1712 = vadd.f32 0.0, %v1711
      %v1713 = vpop.f32.mrf.mxu0
      %v1714 = vadd.f32 0.0, %v1713
      %1715 = vmatmul.bf16.gmra.mxu0 %v1649
      %v1716 = vpop.f32.mrf.mxu0
      %v1717 = vadd.f32 0.0, %v1716
      %v1718 = vpop.f32.mrf.mxu0
      %v1719 = vadd.f32 0.0, %v1718
      %1720 = vmatmul.bf16.gmra.mxu0 %v1652
      %v1721 = vpop.f32.mrf.mxu0
      %v1722 = vadd.f32 0.0, %v1721
      %v1723 = vpop.f32.mrf.mxu0
      %v1724 = vadd.f32 0.0, %v1723
      %1725 = vmatmul.bf16.gmra.mxu0 %v1655
      %v1726 = vpop.f32.mrf.mxu0
      %v1727 = vadd.f32 0.0, %v1726
      %v1728 = vpop.f32.mrf.mxu0
      %v1729 = vadd.f32 0.0, %v1728
      %1730 = vmatmul.bf16.gmra.mxu0 %v1658
      %v1731 = vpop.f32.mrf.mxu0
      %v1732 = vadd.f32 0.0, %v1731
      %v1733 = vpop.f32.mrf.mxu0
      %v1734 = vadd.f32 0.0, %v1733
      %1735 = vmatmul.bf16.gmra.mxu0 %v1661
      %v1736 = vpop.f32.mrf.mxu0
      %v1737 = vadd.f32 0.0, %v1736
      %v1738 = vpop.f32.mrf.mxu0
      %v1739 = vadd.f32 0.0, %v1738
      %1740 = vmatmul.bf16.gmra.mxu0 %v1664
      %v1741 = vpop.f32.mrf.mxu0
      %v1742 = vadd.f32 0.0, %v1741
      %v1743 = vpop.f32.mrf.mxu0
      %v1744 = vadd.f32 0.0, %v1743
      %1745 = vmatmul.bf16.gmra.mxu0 %v1667
      %v1746 = vpop.f32.mrf.mxu0
      %v1747 = vadd.f32 0.0, %v1746
      %v1748 = vpop.f32.mrf.mxu0
      %v1749 = vadd.f32 0.0, %v1748
      %1750 = vmatmul.bf16.gmra.mxu0 %v1670
      %v1751 = vpop.f32.mrf.mxu0
      %v1752 = vadd.f32 0.0, %v1751
      %v1753 = vpop.f32.mrf.mxu0
      %v1754 = vadd.f32 0.0, %v1753
      %1755 = vmatmul.bf16.gmra.mxu0 %v1673
      %v1756 = vpop.f32.mrf.mxu0
      %v1757 = vadd.f32 0.0, %v1756
      %v1758 = vpop.f32.mrf.mxu0
      %v1759 = vadd.f32 0.0, %v1758
      %1760 = vmatmul.bf16.gmra.mxu0 %v1676
      %v1761 = vpop.f32.mrf.mxu0
      %v1762 = vadd.f32 0.0, %v1761
      %v1763 = vpop.f32.mrf.mxu0
      %v1764 = vadd.f32 0.0, %v1763
      %1765 = vmatmul.bf16.gmra.mxu0 %v1679
      %v1766 = vpop.f32.mrf.mxu0
      %v1767 = vadd.f32 0.0, %v1766
      %v1768 = vpop.f32.mrf.mxu0
      %v1769 = vadd.f32 0.0, %v1768
      %1770 = vmatmul.bf16.gmra.mxu0 %v1682
      %v1771 = vpop.f32.mrf.mxu0
      %v1772 = vadd.f32 0.0, %v1771
      %v1773 = vpop.f32.mrf.mxu0
      %v1774 = vadd.f32 0.0, %v1773
      %1775 = vmatmul.bf16.gmra.mxu0 %v1685
      %v1776 = vpop.f32.mrf.mxu0
      %v1777 = vadd.f32 0.0, %v1776
      %v1778 = vpop.f32.mrf.mxu0
      %v1779 = vadd.f32 0.0, %v1778
      %1780 = vmatmul.bf16.gmra.mxu0 %v1688
      %v1781 = vpop.f32.mrf.mxu0
      %v1782 = vadd.f32 0.0, %v1781
      %v1783 = vpop.f32.mrf.mxu0
      %v1784 = vadd.f32 0.0, %v1783
      %1785 = vmatmul.bf16.gmra.mxu0 %v1691
      %v1786 = vpop.f32.mrf.mxu0
      %v1787 = vadd.f32 0.0, %v1786
      %v1788 = vpop.f32.mrf.mxu0
      %v1789 = vadd.f32 0.0, %v1788
      %1790 = vmatmul.bf16.gmra.mxu0 %v1694
      %v1791 = vpop.f32.mrf.mxu0
      %v1792 = vadd.f32 0.0, %v1791
      %v1793 = vpop.f32.mrf.mxu0
      %v1794 = vadd.f32 0.0, %v1793
      %1795 = vmatmul.bf16.gmra.mxu0 %v1697
      %v1796 = vpop.f32.mrf.mxu0
      %v1797 = vadd.f32 0.0, %v1796
      %v1798 = vpop.f32.mrf.mxu0
      %v1799 = vadd.f32 0.0, %v1798
      %1800 = vdwg.mxu0
      %v1801 = vadd.f32 %v1553, %v1712
      %v1802 = vadd.f32 %v1554, %v1714
      %v1803 = vadd.f32 %v1555, %v1717
      %v1804 = vadd.f32 %v1556, %v1719
      %v1805 = vadd.f32 %v1557, %v1722
      %v1806 = vadd.f32 %v1558, %v1724
      %v1807 = vadd.f32 %v1559, %v1727
      %v1808 = vadd.f32 %v1560, %v1729
      %v1809 = vadd.f32 %v1561, %v1732
      %v1810 = vadd.f32 %v1562, %v1734
      %v1811 = vadd.f32 %v1563, %v1737
      %v1812 = vadd.f32 %v1564, %v1739
      %v1813 = vadd.f32 %v1565, %v1742
      %v1814 = vadd.f32 %v1566, %v1744
      %v1815 = vadd.f32 %v1567, %v1747
      %v1816 = vadd.f32 %v1568, %v1749
      %v1817 = vadd.f32 %v1569, %v1752
      %v1818 = vadd.f32 %v1570, %v1754
      %v1819 = vadd.f32 %v1571, %v1757
      %v1820 = vadd.f32 %v1572, %v1759
      %v1821 = vadd.f32 %v1573, %v1762
      %v1822 = vadd.f32 %v1574, %v1764
      %v1823 = vadd.f32 %v1575, %v1767
      %v1824 = vadd.f32 %v1576, %v1769
      %v1825 = vadd.f32 %v1577, %v1772
      %v1826 = vadd.f32 %v1578, %v1774
      %v1827 = vadd.f32 %v1579, %v1777
      %v1828 = vadd.f32 %v1580, %v1779
      %v1829 = vadd.f32 %v1581, %v1782
      %v1830 = vadd.f32 %v1582, %v1784
      %v1831 = vadd.f32 %v1583, %v1787
      %v1832 = vadd.f32 %v1584, %v1789
      %v1833 = vadd.f32 %v1585, %v1792
      %v1834 = vadd.f32 %v1586, %v1794
      %v1835 = vadd.f32 %v1587, %v1797
      %v1836 = vadd.f32 %v1588, %v1799
      %v1837 = vld [vmem:[%s165 + $0x25] sm:$0xff]
      %v1838 = vld [vmem:[%s165 + $0x2d] sm:$0xff]
      %v1839 = vld [vmem:[%s165 + $0x35] sm:$0xff]
      %v1840 = vld [vmem:[%s165 + $0x3d] sm:$0xff]
      %v1841 = vld [vmem:[%s165 + $0x45] sm:$0xff]
      %v1842 = vld [vmem:[%s165 + $0x4d] sm:$0xff]
      %v1843 = vld [vmem:[%s165 + $0x55] sm:$0xff]
      %v1844 = vld [vmem:[%s165 + $0x5d] sm:$0xff]
      %v1845 = vld [vmem:[%s165 + $0x65] sm:$0xff]
      %v1846 = vld [vmem:[%s165 + $0x6d] sm:$0xff]
      %v1847 = vld [vmem:[%s165 + $0x75] sm:$0xff]
      %v1848 = vld [vmem:[%s165 + $0x7d] sm:$0xff]
      %v1849 = vld [vmem:[%s165 + $0x85] sm:$0xff]
      %v1850 = vld [vmem:[%s165 + $0x8d] sm:$0xff]
      %v1851 = vld [vmem:[%s165 + $0x95] sm:$0xff]
      %v1852 = vld [vmem:[%s165 + $0x9d] sm:$0xff]
      %v1853 = vld [vmem:[%s165 + $0xa5] sm:$0xff]
      %v1854 = vld [vmem:[%s165 + $0xad] sm:$0xff]
      %v1855 = vld [vmem:[%s165 + $0xb5] sm:$0xff]
      %v1856 = vld [vmem:[%s165 + $0xbd] sm:$0xff]
      %v1857 = vld [vmem:[%s165 + $0xc5] sm:$0xff]
      %v1858 = vld [vmem:[%s165 + $0xcd] sm:$0xff]
      %v1859 = vld [vmem:[%s165 + $0xd5] sm:$0xff]
      %v1860 = vld [vmem:[%s165 + $0xdd] sm:$0xff]
      %v1861 = vld [vmem:[%s165 + $0xe5] sm:$0xff]
      %v1862 = vld [vmem:[%s165 + $0xed] sm:$0xff]
      %v1863 = vld [vmem:[%s165 + $0xf5] sm:$0xff]
      %v1864 = vld [vmem:[%s165 + $0xfd] sm:$0xff]
      %v1865 = vld [vmem:[%s165 + $0x105] sm:$0xff]
      %v1866 = vld [vmem:[%s165 + $0x10d] sm:$0xff]
      %v1867 = vld [vmem:[%s165 + $0x115] sm:$0xff]
      %v1868 = vld [vmem:[%s165 + $0x11d] sm:$0xff]
      %v1869 = vld [vmem:[%s165 + $0x125] sm:$0xff]
      %v1870 = vld [vmem:[%s165 + $0x12d] sm:$0xff]
      %v1871 = vld [vmem:[%s165 + $0x135] sm:$0xff]
      %v1872 = vld [vmem:[%s165 + $0x13d] sm:$0xff]
      %v1873 = vpack.c.bf16 %v1838, %v1837
      %v1874 = vpack.c.bf16 %v1840, %v1839
      %v1875 = vpack.c.bf16 %v1842, %v1841
      %v1876 = vpack.c.bf16 %v1844, %v1843
      %v1877 = vpack.c.bf16 %v1846, %v1845
      %v1878 = vpack.c.bf16 %v1848, %v1847
      %v1879 = vpack.c.bf16 %v1850, %v1849
      %v1880 = vpack.c.bf16 %v1852, %v1851
      %v1881 = vpack.c.bf16 %v1854, %v1853
      %v1882 = vpack.c.bf16 %v1856, %v1855
      %v1883 = vpack.c.bf16 %v1858, %v1857
      %v1884 = vpack.c.bf16 %v1860, %v1859
      %v1885 = vpack.c.bf16 %v1862, %v1861
      %v1886 = vpack.c.bf16 %v1864, %v1863
      %v1887 = vpack.c.bf16 %v1866, %v1865
      %v1888 = vpack.c.bf16 %v1868, %v1867
      %v1889 = vpack.c.bf16 %v1870, %v1869
      %v1890 = vpack.c.bf16 %v1872, %v1871
      %s1891 = scalar_lea.vmem %s1, 14
      %v1892 = vld [vmem:[%s1891] sm:$0x3]
      %v1894 = vsel %vm283, %v1873, 0
      %v1897 = vsel %vm283, %v1874, 0
      %v1900 = vsel %vm283, %v1875, 0
      %v1903 = vsel %vm283, %v1876, 0
      %v1906 = vsel %vm283, %v1877, 0
      %v1909 = vsel %vm283, %v1878, 0
      %v1912 = vsel %vm283, %v1879, 0
      %v1915 = vsel %vm283, %v1880, 0
      %v1918 = vsel %vm283, %v1881, 0
      %v1921 = vsel %vm283, %v1882, 0
      %v1924 = vsel %vm283, %v1883, 0
      %v1927 = vsel %vm283, %v1884, 0
      %v1930 = vsel %vm283, %v1885, 0
      %v1933 = vsel %vm283, %v1886, 0
      %v1936 = vsel %vm283, %v1887, 0
      %v1939 = vsel %vm283, %v1888, 0
      %v1942 = vsel %vm283, %v1889, 0
      %v1945 = vsel %vm283, %v1890, 0
      %v1948 = vsel %vm338, %v1892, 0
      %1950 = vmatpush.bf16.msra.mxu0 0
      %1951 = vmatpush.bf16.msra.mxu0 0
      %1952 = vmatpush.bf16.msra.mxu0 0
      %1953 = vmatpush.bf16.msra.mxu0 0
      %1954 = vmatpush.bf16.msra.mxu0 0
      %1955 = vmatpush.bf16.msra.mxu0 0
      %1956 = vmatpush.bf16.msra.mxu0 0
      %1957 = vmatpush.bf16.msra.mxu0 %v1948
      %1958 = vmatmul.bf16.gmra.mxu0 %v1894
      %v1959 = vpop.f32.mrf.mxu0
      %v1960 = vadd.f32 0.0, %v1959
      %v1961 = vpop.f32.mrf.mxu0
      %v1962 = vadd.f32 0.0, %v1961
      %1963 = vmatmul.bf16.gmra.mxu0 %v1897
      %v1964 = vpop.f32.mrf.mxu0
      %v1965 = vadd.f32 0.0, %v1964
      %v1966 = vpop.f32.mrf.mxu0
      %v1967 = vadd.f32 0.0, %v1966
      %1968 = vmatmul.bf16.gmra.mxu0 %v1900
      %v1969 = vpop.f32.mrf.mxu0
      %v1970 = vadd.f32 0.0, %v1969
      %v1971 = vpop.f32.mrf.mxu0
      %v1972 = vadd.f32 0.0, %v1971
      %1973 = vmatmul.bf16.gmra.mxu0 %v1903
      %v1974 = vpop.f32.mrf.mxu0
      %v1975 = vadd.f32 0.0, %v1974
      %v1976 = vpop.f32.mrf.mxu0
      %v1977 = vadd.f32 0.0, %v1976
      %1978 = vmatmul.bf16.gmra.mxu0 %v1906
      %v1979 = vpop.f32.mrf.mxu0
      %v1980 = vadd.f32 0.0, %v1979
      %v1981 = vpop.f32.mrf.mxu0
      %v1982 = vadd.f32 0.0, %v1981
      %1983 = vmatmul.bf16.gmra.mxu0 %v1909
      %v1984 = vpop.f32.mrf.mxu0
      %v1985 = vadd.f32 0.0, %v1984
      %v1986 = vpop.f32.mrf.mxu0
      %v1987 = vadd.f32 0.0, %v1986
      %1988 = vmatmul.bf16.gmra.mxu0 %v1912
      %v1989 = vpop.f32.mrf.mxu0
      %v1990 = vadd.f32 0.0, %v1989
      %v1991 = vpop.f32.mrf.mxu0
      %v1992 = vadd.f32 0.0, %v1991
      %1993 = vmatmul.bf16.gmra.mxu0 %v1915
      %v1994 = vpop.f32.mrf.mxu0
      %v1995 = vadd.f32 0.0, %v1994
      %v1996 = vpop.f32.mrf.mxu0
      %v1997 = vadd.f32 0.0, %v1996
      %1998 = vmatmul.bf16.gmra.mxu0 %v1918
      %v1999 = vpop.f32.mrf.mxu0
      %v2000 = vadd.f32 0.0, %v1999
      %v2001 = vpop.f32.mrf.mxu0
      %v2002 = vadd.f32 0.0, %v2001
      %2003 = vmatmul.bf16.gmra.mxu0 %v1921
      %v2004 = vpop.f32.mrf.mxu0
      %v2005 = vadd.f32 0.0, %v2004
      %v2006 = vpop.f32.mrf.mxu0
      %v2007 = vadd.f32 0.0, %v2006
      %2008 = vmatmul.bf16.gmra.mxu0 %v1924
      %v2009 = vpop.f32.mrf.mxu0
      %v2010 = vadd.f32 0.0, %v2009
      %v2011 = vpop.f32.mrf.mxu0
      %v2012 = vadd.f32 0.0, %v2011
      %2013 = vmatmul.bf16.gmra.mxu0 %v1927
      %v2014 = vpop.f32.mrf.mxu0
      %v2015 = vadd.f32 0.0, %v2014
      %v2016 = vpop.f32.mrf.mxu0
      %v2017 = vadd.f32 0.0, %v2016
      %2018 = vmatmul.bf16.gmra.mxu0 %v1930
      %v2019 = vpop.f32.mrf.mxu0
      %v2020 = vadd.f32 0.0, %v2019
      %v2021 = vpop.f32.mrf.mxu0
      %v2022 = vadd.f32 0.0, %v2021
      %2023 = vmatmul.bf16.gmra.mxu0 %v1933
      %v2024 = vpop.f32.mrf.mxu0
      %v2025 = vadd.f32 0.0, %v2024
      %v2026 = vpop.f32.mrf.mxu0
      %v2027 = vadd.f32 0.0, %v2026
      %2028 = vmatmul.bf16.gmra.mxu0 %v1936
      %v2029 = vpop.f32.mrf.mxu0
      %v2030 = vadd.f32 0.0, %v2029
      %v2031 = vpop.f32.mrf.mxu0
      %v2032 = vadd.f32 0.0, %v2031
      %2033 = vmatmul.bf16.gmra.mxu0 %v1939
      %v2034 = vpop.f32.mrf.mxu0
      %v2035 = vadd.f32 0.0, %v2034
      %v2036 = vpop.f32.mrf.mxu0
      %v2037 = vadd.f32 0.0, %v2036
      %2038 = vmatmul.bf16.gmra.mxu0 %v1942
      %v2039 = vpop.f32.mrf.mxu0
      %v2040 = vadd.f32 0.0, %v2039
      %v2041 = vpop.f32.mrf.mxu0
      %v2042 = vadd.f32 0.0, %v2041
      %2043 = vmatmul.bf16.gmra.mxu0 %v1945
      %v2044 = vpop.f32.mrf.mxu0
      %v2045 = vadd.f32 0.0, %v2044
      %v2046 = vpop.f32.mrf.mxu0
      %v2047 = vadd.f32 0.0, %v2046
      %2048 = vdwg.mxu0
      %v2049 = vadd.f32 %v1801, %v1960
      %v2050 = vadd.f32 %v1802, %v1962
      %v2051 = vadd.f32 %v1803, %v1965
      %v2052 = vadd.f32 %v1804, %v1967
      %v2053 = vadd.f32 %v1805, %v1970
      %v2054 = vadd.f32 %v1806, %v1972
      %v2055 = vadd.f32 %v1807, %v1975
      %v2056 = vadd.f32 %v1808, %v1977
      %v2057 = vadd.f32 %v1809, %v1980
      %v2058 = vadd.f32 %v1810, %v1982
      %v2059 = vadd.f32 %v1811, %v1985
      %v2060 = vadd.f32 %v1812, %v1987
      %v2061 = vadd.f32 %v1813, %v1990
      %v2062 = vadd.f32 %v1814, %v1992
      %v2063 = vadd.f32 %v1815, %v1995
      %v2064 = vadd.f32 %v1816, %v1997
      %v2065 = vadd.f32 %v1817, %v2000
      %v2066 = vadd.f32 %v1818, %v2002
      %v2067 = vadd.f32 %v1819, %v2005
      %v2068 = vadd.f32 %v1820, %v2007
      %v2069 = vadd.f32 %v1821, %v2010
      %v2070 = vadd.f32 %v1822, %v2012
      %v2071 = vadd.f32 %v1823, %v2015
      %v2072 = vadd.f32 %v1824, %v2017
      %v2073 = vadd.f32 %v1825, %v2020
      %v2074 = vadd.f32 %v1826, %v2022
      %v2075 = vadd.f32 %v1827, %v2025
      %v2076 = vadd.f32 %v1828, %v2027
      %v2077 = vadd.f32 %v1829, %v2030
      %v2078 = vadd.f32 %v1830, %v2032
      %v2079 = vadd.f32 %v1831, %v2035
      %v2080 = vadd.f32 %v1832, %v2037
      %v2081 = vadd.f32 %v1833, %v2040
      %v2082 = vadd.f32 %v1834, %v2042
      %v2083 = vadd.f32 %v1835, %v2045
      %v2084 = vadd.f32 %v1836, %v2047
      %v2085 = vld [vmem:[%s165 + $0x26] sm:$0xff]
      %v2086 = vld [vmem:[%s165 + $0x2e] sm:$0xff]
      %v2087 = vld [vmem:[%s165 + $0x36] sm:$0xff]
      %v2088 = vld [vmem:[%s165 + $0x3e] sm:$0xff]
      %v2089 = vld [vmem:[%s165 + $0x46] sm:$0xff]
      %v2090 = vld [vmem:[%s165 + $0x4e] sm:$0xff]
      %v2091 = vld [vmem:[%s165 + $0x56] sm:$0xff]
      %v2092 = vld [vmem:[%s165 + $0x5e] sm:$0xff]
      %v2093 = vld [vmem:[%s165 + $0x66] sm:$0xff]
      %v2094 = vld [vmem:[%s165 + $0x6e] sm:$0xff]
      %v2095 = vld [vmem:[%s165 + $0x76] sm:$0xff]
      %v2096 = vld [vmem:[%s165 + $0x7e] sm:$0xff]
      %v2097 = vld [vmem:[%s165 + $0x86] sm:$0xff]
      %v2098 = vld [vmem:[%s165 + $0x8e] sm:$0xff]
      %v2099 = vld [vmem:[%s165 + $0x96] sm:$0xff]
      %v2100 = vld [vmem:[%s165 + $0x9e] sm:$0xff]
      %v2101 = vld [vmem:[%s165 + $0xa6] sm:$0xff]
      %v2102 = vld [vmem:[%s165 + $0xae] sm:$0xff]
      %v2103 = vld [vmem:[%s165 + $0xb6] sm:$0xff]
      %v2104 = vld [vmem:[%s165 + $0xbe] sm:$0xff]
      %v2105 = vld [vmem:[%s165 + $0xc6] sm:$0xff]
      %v2106 = vld [vmem:[%s165 + $0xce] sm:$0xff]
      %v2107 = vld [vmem:[%s165 + $0xd6] sm:$0xff]
      %v2108 = vld [vmem:[%s165 + $0xde] sm:$0xff]
      %v2109 = vld [vmem:[%s165 + $0xe6] sm:$0xff]
      %v2110 = vld [vmem:[%s165 + $0xee] sm:$0xff]
      %v2111 = vld [vmem:[%s165 + $0xf6] sm:$0xff]
      %v2112 = vld [vmem:[%s165 + $0xfe] sm:$0xff]
      %v2113 = vld [vmem:[%s165 + $0x106] sm:$0xff]
      %v2114 = vld [vmem:[%s165 + $0x10e] sm:$0xff]
      %v2115 = vld [vmem:[%s165 + $0x116] sm:$0xff]
      %v2116 = vld [vmem:[%s165 + $0x11e] sm:$0xff]
      %v2117 = vld [vmem:[%s165 + $0x126] sm:$0xff]
      %v2118 = vld [vmem:[%s165 + $0x12e] sm:$0xff]
      %v2119 = vld [vmem:[%s165 + $0x136] sm:$0xff]
      %v2120 = vld [vmem:[%s165 + $0x13e] sm:$0xff]
      %v2121 = vpack.c.bf16 %v2086, %v2085
      %v2122 = vpack.c.bf16 %v2088, %v2087
      %v2123 = vpack.c.bf16 %v2090, %v2089
      %v2124 = vpack.c.bf16 %v2092, %v2091
      %v2125 = vpack.c.bf16 %v2094, %v2093
      %v2126 = vpack.c.bf16 %v2096, %v2095
      %v2127 = vpack.c.bf16 %v2098, %v2097
      %v2128 = vpack.c.bf16 %v2100, %v2099
      %v2129 = vpack.c.bf16 %v2102, %v2101
      %v2130 = vpack.c.bf16 %v2104, %v2103
      %v2131 = vpack.c.bf16 %v2106, %v2105
      %v2132 = vpack.c.bf16 %v2108, %v2107
      %v2133 = vpack.c.bf16 %v2110, %v2109
      %v2134 = vpack.c.bf16 %v2112, %v2111
      %v2135 = vpack.c.bf16 %v2114, %v2113
      %v2136 = vpack.c.bf16 %v2116, %v2115
      %v2137 = vpack.c.bf16 %v2118, %v2117
      %v2138 = vpack.c.bf16 %v2120, %v2119
      %s2139 = scalar_lea.vmem %s1, 16
      %v2140 = vld [vmem:[%s2139] sm:$0x3]
      %v2142 = vsel %vm283, %v2121, 0
      %v2145 = vsel %vm283, %v2122, 0
      %v2148 = vsel %vm283, %v2123, 0
      %v2151 = vsel %vm283, %v2124, 0
      %v2154 = vsel %vm283, %v2125, 0
      %v2157 = vsel %vm283, %v2126, 0
      %v2160 = vsel %vm283, %v2127, 0
      %v2163 = vsel %vm283, %v2128, 0
      %v2166 = vsel %vm283, %v2129, 0
      %v2169 = vsel %vm283, %v2130, 0
      %v2172 = vsel %vm283, %v2131, 0
      %v2175 = vsel %vm283, %v2132, 0
      %v2178 = vsel %vm283, %v2133, 0
      %v2181 = vsel %vm283, %v2134, 0
      %v2184 = vsel %vm283, %v2135, 0
      %v2187 = vsel %vm283, %v2136, 0
      %v2190 = vsel %vm283, %v2137, 0
      %v2193 = vsel %vm283, %v2138, 0
      %v2196 = vsel %vm338, %v2140, 0
      %2198 = vmatpush.bf16.msra.mxu0 0
      %2199 = vmatpush.bf16.msra.mxu0 0
      %2200 = vmatpush.bf16.msra.mxu0 0
      %2201 = vmatpush.bf16.msra.mxu0 0
      %2202 = vmatpush.bf16.msra.mxu0 0
      %2203 = vmatpush.bf16.msra.mxu0 0
      %2204 = vmatpush.bf16.msra.mxu0 0
      %2205 = vmatpush.bf16.msra.mxu0 %v2196
      %2206 = vmatmul.bf16.gmra.mxu0 %v2142
      %v2207 = vpop.f32.mrf.mxu0
      %v2208 = vadd.f32 0.0, %v2207
      %v2209 = vpop.f32.mrf.mxu0
      %v2210 = vadd.f32 0.0, %v2209
      %2211 = vmatmul.bf16.gmra.mxu0 %v2145
      %v2212 = vpop.f32.mrf.mxu0
      %v2213 = vadd.f32 0.0, %v2212
      %v2214 = vpop.f32.mrf.mxu0
      %v2215 = vadd.f32 0.0, %v2214
      %2216 = vmatmul.bf16.gmra.mxu0 %v2148
      %v2217 = vpop.f32.mrf.mxu0
      %v2218 = vadd.f32 0.0, %v2217
      %v2219 = vpop.f32.mrf.mxu0
      %v2220 = vadd.f32 0.0, %v2219
      %2221 = vmatmul.bf16.gmra.mxu0 %v2151
      %v2222 = vpop.f32.mrf.mxu0
      %v2223 = vadd.f32 0.0, %v2222
      %v2224 = vpop.f32.mrf.mxu0
      %v2225 = vadd.f32 0.0, %v2224
      %2226 = vmatmul.bf16.gmra.mxu0 %v2154
      %v2227 = vpop.f32.mrf.mxu0
      %v2228 = vadd.f32 0.0, %v2227
      %v2229 = vpop.f32.mrf.mxu0
      %v2230 = vadd.f32 0.0, %v2229
      %2231 = vmatmul.bf16.gmra.mxu0 %v2157
      %v2232 = vpop.f32.mrf.mxu0
      %v2233 = vadd.f32 0.0, %v2232
      %v2234 = vpop.f32.mrf.mxu0
      %v2235 = vadd.f32 0.0, %v2234
      %2236 = vmatmul.bf16.gmra.mxu0 %v2160
      %v2237 = vpop.f32.mrf.mxu0
      %v2238 = vadd.f32 0.0, %v2237
      %v2239 = vpop.f32.mrf.mxu0
      %v2240 = vadd.f32 0.0, %v2239
      %2241 = vmatmul.bf16.gmra.mxu0 %v2163
      %v2242 = vpop.f32.mrf.mxu0
      %v2243 = vadd.f32 0.0, %v2242
      %v2244 = vpop.f32.mrf.mxu0
      %v2245 = vadd.f32 0.0, %v2244
      %2246 = vmatmul.bf16.gmra.mxu0 %v2166
      %v2247 = vpop.f32.mrf.mxu0
      %v2248 = vadd.f32 0.0, %v2247
      %v2249 = vpop.f32.mrf.mxu0
      %v2250 = vadd.f32 0.0, %v2249
      %2251 = vmatmul.bf16.gmra.mxu0 %v2169
      %v2252 = vpop.f32.mrf.mxu0
      %v2253 = vadd.f32 0.0, %v2252
      %v2254 = vpop.f32.mrf.mxu0
      %v2255 = vadd.f32 0.0, %v2254
      %2256 = vmatmul.bf16.gmra.mxu0 %v2172
      %v2257 = vpop.f32.mrf.mxu0
      %v2258 = vadd.f32 0.0, %v2257
      %v2259 = vpop.f32.mrf.mxu0
      %v2260 = vadd.f32 0.0, %v2259
      %2261 = vmatmul.bf16.gmra.mxu0 %v2175
      %v2262 = vpop.f32.mrf.mxu0
      %v2263 = vadd.f32 0.0, %v2262
      %v2264 = vpop.f32.mrf.mxu0
      %v2265 = vadd.f32 0.0, %v2264
      %2266 = vmatmul.bf16.gmra.mxu0 %v2178
      %v2267 = vpop.f32.mrf.mxu0
      %v2268 = vadd.f32 0.0, %v2267
      %v2269 = vpop.f32.mrf.mxu0
      %v2270 = vadd.f32 0.0, %v2269
      %2271 = vmatmul.bf16.gmra.mxu0 %v2181
      %v2272 = vpop.f32.mrf.mxu0
      %v2273 = vadd.f32 0.0, %v2272
      %v2274 = vpop.f32.mrf.mxu0
      %v2275 = vadd.f32 0.0, %v2274
      %2276 = vmatmul.bf16.gmra.mxu0 %v2184
      %v2277 = vpop.f32.mrf.mxu0
      %v2278 = vadd.f32 0.0, %v2277
      %v2279 = vpop.f32.mrf.mxu0
      %v2280 = vadd.f32 0.0, %v2279
      %2281 = vmatmul.bf16.gmra.mxu0 %v2187
      %v2282 = vpop.f32.mrf.mxu0
      %v2283 = vadd.f32 0.0, %v2282
      %v2284 = vpop.f32.mrf.mxu0
      %v2285 = vadd.f32 0.0, %v2284
      %2286 = vmatmul.bf16.gmra.mxu0 %v2190
      %v2287 = vpop.f32.mrf.mxu0
      %v2288 = vadd.f32 0.0, %v2287
      %v2289 = vpop.f32.mrf.mxu0
      %v2290 = vadd.f32 0.0, %v2289
      %2291 = vmatmul.bf16.gmra.mxu0 %v2193
      %v2292 = vpop.f32.mrf.mxu0
      %v2293 = vadd.f32 0.0, %v2292
      %v2294 = vpop.f32.mrf.mxu0
      %v2295 = vadd.f32 0.0, %v2294
      %2296 = vdwg.mxu0
      %v2297 = vadd.f32 %v2049, %v2208
      %v2298 = vadd.f32 %v2050, %v2210
      %v2299 = vadd.f32 %v2051, %v2213
      %v2300 = vadd.f32 %v2052, %v2215
      %v2301 = vadd.f32 %v2053, %v2218
      %v2302 = vadd.f32 %v2054, %v2220
      %v2303 = vadd.f32 %v2055, %v2223
      %v2304 = vadd.f32 %v2056, %v2225
      %v2305 = vadd.f32 %v2057, %v2228
      %v2306 = vadd.f32 %v2058, %v2230
      %v2307 = vadd.f32 %v2059, %v2233
      %v2308 = vadd.f32 %v2060, %v2235
      %v2309 = vadd.f32 %v2061, %v2238
      %v2310 = vadd.f32 %v2062, %v2240
      %v2311 = vadd.f32 %v2063, %v2243
      %v2312 = vadd.f32 %v2064, %v2245
      %v2313 = vadd.f32 %v2065, %v2248
      %v2314 = vadd.f32 %v2066, %v2250
      %v2315 = vadd.f32 %v2067, %v2253
      %v2316 = vadd.f32 %v2068, %v2255
      %v2317 = vadd.f32 %v2069, %v2258
      %v2318 = vadd.f32 %v2070, %v2260
      %v2319 = vadd.f32 %v2071, %v2263
      %v2320 = vadd.f32 %v2072, %v2265
      %v2321 = vadd.f32 %v2073, %v2268
      %v2322 = vadd.f32 %v2074, %v2270
      %v2323 = vadd.f32 %v2075, %v2273
      %v2324 = vadd.f32 %v2076, %v2275
      %v2325 = vadd.f32 %v2077, %v2278
      %v2326 = vadd.f32 %v2078, %v2280
      %v2327 = vadd.f32 %v2079, %v2283
      %v2328 = vadd.f32 %v2080, %v2285
      %v2329 = vadd.f32 %v2081, %v2288
      %v2330 = vadd.f32 %v2082, %v2290
      %v2331 = vadd.f32 %v2083, %v2293
      %v2332 = vadd.f32 %v2084, %v2295
      %v2333 = vld [vmem:[%s2] sm:$0x1]
      %v2335 = vperm.slane %v2333, 0
      %v2337 = vadd.f32 %v2297, %v2335
      %v2338 = vadd.f32 %v2298, %v2335
      %v2339 = vadd.f32 %v2299, %v2335
      %v2340 = vadd.f32 %v2300, %v2335
      %v2341 = vadd.f32 %v2301, %v2335
      %v2342 = vadd.f32 %v2302, %v2335
      %v2343 = vadd.f32 %v2303, %v2335
      %v2344 = vadd.f32 %v2304, %v2335
      %v2345 = vadd.f32 %v2305, %v2335
      %v2346 = vadd.f32 %v2306, %v2335
      %v2347 = vadd.f32 %v2307, %v2335
      %v2348 = vadd.f32 %v2308, %v2335
      %v2349 = vadd.f32 %v2309, %v2335
      %v2350 = vadd.f32 %v2310, %v2335
      %v2351 = vadd.f32 %v2311, %v2335
      %v2352 = vadd.f32 %v2312, %v2335
      %v2353 = vadd.f32 %v2313, %v2335
      %v2354 = vadd.f32 %v2314, %v2335
      %v2355 = vadd.f32 %v2315, %v2335
      %v2356 = vadd.f32 %v2316, %v2335
      %v2357 = vadd.f32 %v2317, %v2335
      %v2358 = vadd.f32 %v2318, %v2335
      %v2359 = vadd.f32 %v2319, %v2335
      %v2360 = vadd.f32 %v2320, %v2335
      %v2361 = vadd.f32 %v2321, %v2335
      %v2362 = vadd.f32 %v2322, %v2335
      %v2363 = vadd.f32 %v2323, %v2335
      %v2364 = vadd.f32 %v2324, %v2335
      %v2365 = vadd.f32 %v2325, %v2335
      %v2366 = vadd.f32 %v2326, %v2335
      %v2367 = vadd.f32 %v2327, %v2335
      %v2368 = vadd.f32 %v2328, %v2335
      %v2369 = vadd.f32 %v2329, %v2335
      %v2370 = vadd.f32 %v2330, %v2335
      %v2371 = vadd.f32 %v2331, %v2335
      %v2372 = vadd.f32 %v2332, %v2335
      %v2373 = vxor.u32 %v2337, 2147483648
      %v2374 = vxor.u32 %v2338, 2147483648
      %v2375 = vxor.u32 %v2339, 2147483648
      %v2376 = vxor.u32 %v2340, 2147483648
      %v2377 = vxor.u32 %v2341, 2147483648
      %v2378 = vxor.u32 %v2342, 2147483648
      %v2379 = vxor.u32 %v2343, 2147483648
      %v2380 = vxor.u32 %v2344, 2147483648
      %v2381 = vxor.u32 %v2345, 2147483648
      %v2382 = vxor.u32 %v2346, 2147483648
      %v2383 = vxor.u32 %v2347, 2147483648
      %v2384 = vxor.u32 %v2348, 2147483648
      %v2385 = vxor.u32 %v2349, 2147483648
      %v2386 = vxor.u32 %v2350, 2147483648
      %v2387 = vxor.u32 %v2351, 2147483648
      %v2388 = vxor.u32 %v2352, 2147483648
      %v2389 = vxor.u32 %v2353, 2147483648
      %v2390 = vxor.u32 %v2354, 2147483648
      %v2391 = vxor.u32 %v2355, 2147483648
      %v2392 = vxor.u32 %v2356, 2147483648
      %v2393 = vxor.u32 %v2357, 2147483648
      %v2394 = vxor.u32 %v2358, 2147483648
      %v2395 = vxor.u32 %v2359, 2147483648
      %v2396 = vxor.u32 %v2360, 2147483648
      %v2397 = vxor.u32 %v2361, 2147483648
      %v2398 = vxor.u32 %v2362, 2147483648
      %v2399 = vxor.u32 %v2363, 2147483648
      %v2400 = vxor.u32 %v2364, 2147483648
      %v2401 = vxor.u32 %v2365, 2147483648
      %v2402 = vxor.u32 %v2366, 2147483648
      %v2403 = vxor.u32 %v2367, 2147483648
      %v2404 = vxor.u32 %v2368, 2147483648
      %v2405 = vxor.u32 %v2369, 2147483648
      %v2406 = vxor.u32 %v2370, 2147483648
      %v2407 = vxor.u32 %v2371, 2147483648
      %v2408 = vxor.u32 %v2372, 2147483648
      %v2409 = vmul.f32 %v2373, 1.442695
      %v2410 = vpow.pop %v2409
      %v2411 = vmul.f32 %v2374, 1.442695
      %v2412 = vpow.pop %v2411
      %v2413 = vmul.f32 %v2375, 1.442695
      %v2414 = vpow.pop %v2413
      %v2415 = vmul.f32 %v2376, 1.442695
      %v2416 = vpow.pop %v2415
      %v2417 = vmul.f32 %v2377, 1.442695
      %v2418 = vpow.pop %v2417
      %v2419 = vmul.f32 %v2378, 1.442695
      %v2420 = vpow.pop %v2419
      %v2421 = vmul.f32 %v2379, 1.442695
      %v2422 = vpow.pop %v2421
      %v2423 = vmul.f32 %v2380, 1.442695
      %v2424 = vpow.pop %v2423
      %v2425 = vmul.f32 %v2381, 1.442695
      %v2426 = vpow.pop %v2425
      %v2427 = vmul.f32 %v2382, 1.442695
      %v2428 = vpow.pop %v2427
      %v2429 = vmul.f32 %v2383, 1.442695
      %v2430 = vpow.pop %v2429
      %v2431 = vmul.f32 %v2384, 1.442695
      %v2432 = vpow.pop %v2431
      %v2433 = vmul.f32 %v2385, 1.442695
      %v2434 = vpow.pop %v2433
      %v2435 = vmul.f32 %v2386, 1.442695
      %v2436 = vpow.pop %v2435
      %v2437 = vmul.f32 %v2387, 1.442695
      %v2438 = vpow.pop %v2437
      %v2439 = vmul.f32 %v2388, 1.442695
      %v2440 = vpow.pop %v2439
      %v2441 = vmul.f32 %v2389, 1.442695
      %v2442 = vpow.pop %v2441
      %v2443 = vmul.f32 %v2390, 1.442695
      %v2444 = vpow.pop %v2443
      %v2445 = vmul.f32 %v2391, 1.442695
      %v2446 = vpow.pop %v2445
      %v2447 = vmul.f32 %v2392, 1.442695
      %v2448 = vpow.pop %v2447
      %v2449 = vmul.f32 %v2393, 1.442695
      %v2450 = vpow.pop %v2449
      %v2451 = vmul.f32 %v2394, 1.442695
      %v2452 = vpow.pop %v2451
      %v2453 = vmul.f32 %v2395, 1.442695
      %v2454 = vpow.pop %v2453
      %v2455 = vmul.f32 %v2396, 1.442695
      %v2456 = vpow.pop %v2455
      %v2457 = vmul.f32 %v2397, 1.442695
      %v2458 = vpow.pop %v2457
      %v2459 = vmul.f32 %v2398, 1.442695
      %v2460 = vpow.pop %v2459
      %v2461 = vmul.f32 %v2399, 1.442695
      %v2462 = vpow.pop %v2461
      %v2463 = vmul.f32 %v2400, 1.442695
      %v2464 = vpow.pop %v2463
      %v2465 = vmul.f32 %v2401, 1.442695
      %v2466 = vpow.pop %v2465
      %v2467 = vmul.f32 %v2402, 1.442695
      %v2468 = vpow.pop %v2467
      %v2469 = vmul.f32 %v2403, 1.442695
      %v2470 = vpow.pop %v2469
      %v2471 = vmul.f32 %v2404, 1.442695
      %v2472 = vpow.pop %v2471
      %v2473 = vmul.f32 %v2405, 1.442695
      %v2474 = vpow.pop %v2473
      %v2475 = vmul.f32 %v2406, 1.442695
      %v2476 = vpow.pop %v2475
      %v2477 = vmul.f32 %v2407, 1.442695
      %v2478 = vpow.pop %v2477
      %v2479 = vmul.f32 %v2408, 1.442695
      %v2480 = vpow.pop %v2479
      %v2481 = vadd.f32 %v2410, 1.0
      %v2482 = vadd.f32 %v2412, 1.0
      %v2483 = vadd.f32 %v2414, 1.0
      %v2484 = vadd.f32 %v2416, 1.0
      %v2485 = vadd.f32 %v2418, 1.0
      %v2486 = vadd.f32 %v2420, 1.0
      %v2487 = vadd.f32 %v2422, 1.0
      %v2488 = vadd.f32 %v2424, 1.0
      %v2489 = vadd.f32 %v2426, 1.0
      %v2490 = vadd.f32 %v2428, 1.0
      %v2491 = vadd.f32 %v2430, 1.0
      %v2492 = vadd.f32 %v2432, 1.0
      %v2493 = vadd.f32 %v2434, 1.0
      %v2494 = vadd.f32 %v2436, 1.0
      %v2495 = vadd.f32 %v2438, 1.0
      %v2496 = vadd.f32 %v2440, 1.0
      %v2497 = vadd.f32 %v2442, 1.0
      %v2498 = vadd.f32 %v2444, 1.0
      %v2499 = vadd.f32 %v2446, 1.0
      %v2500 = vadd.f32 %v2448, 1.0
      %v2501 = vadd.f32 %v2450, 1.0
      %v2502 = vadd.f32 %v2452, 1.0
      %v2503 = vadd.f32 %v2454, 1.0
      %v2504 = vadd.f32 %v2456, 1.0
      %v2505 = vadd.f32 %v2458, 1.0
      %v2506 = vadd.f32 %v2460, 1.0
      %v2507 = vadd.f32 %v2462, 1.0
      %v2508 = vadd.f32 %v2464, 1.0
      %v2509 = vadd.f32 %v2466, 1.0
      %v2510 = vadd.f32 %v2468, 1.0
      %v2511 = vadd.f32 %v2470, 1.0
      %v2512 = vadd.f32 %v2472, 1.0
      %v2513 = vadd.f32 %v2474, 1.0
      %v2514 = vadd.f32 %v2476, 1.0
      %v2515 = vadd.f32 %v2478, 1.0
      %v2516 = vadd.f32 %v2480, 1.0
      %v2517 = vrcp.pop %v2481
      %v2518 = vmul.f32 %v2481, %v2517
      %v2519 = vsub.f32 1.0, %v2518
      %v2520 = vmul.f32 %v2517, %v2519
      %v2521 = vadd.f32 %v2517, %v2520
      %vm2522 = vweird.f32 %v2481
      %vm2523 = vweird.f32 %v2517
      %vm2524 = vmor %vm2522, %vm2523
      %v2525 = vsel %vm2524, %v2517, %v2521
      %v2526 = vand.u32 2147483647, %v2481
      %vm2527 = vcmp.eq.f32.partialorder %v2526, 8.507059e+37
      %v2528 = vand.u32 %v2481, 2147483648
      %v2529 = vor.u32 1.1754944e-38, %v2528
      %v2530 = vsel %vm2527, %v2529, %v2525
      %v2531 = vmul.f32 1.0, %v2530
      %v2532 = vrcp.pop %v2482
      %v2533 = vmul.f32 %v2482, %v2532
      %v2534 = vsub.f32 1.0, %v2533
      %v2535 = vmul.f32 %v2532, %v2534
      %v2536 = vadd.f32 %v2532, %v2535
      %vm2537 = vweird.f32 %v2482
      %vm2538 = vweird.f32 %v2532
      %vm2539 = vmor %vm2537, %vm2538
      %v2540 = vsel %vm2539, %v2532, %v2536
      %v2541 = vand.u32 2147483647, %v2482
      %vm2542 = vcmp.eq.f32.partialorder %v2541, 8.507059e+37
      %v2543 = vand.u32 %v2482, 2147483648
      %v2544 = vor.u32 1.1754944e-38, %v2543
      %v2545 = vsel %vm2542, %v2544, %v2540
      %v2546 = vmul.f32 1.0, %v2545
      %v2547 = vrcp.pop %v2483
      %v2548 = vmul.f32 %v2483, %v2547
      %v2549 = vsub.f32 1.0, %v2548
      %v2550 = vmul.f32 %v2547, %v2549
      %v2551 = vadd.f32 %v2547, %v2550
      %vm2552 = vweird.f32 %v2483
      %vm2553 = vweird.f32 %v2547
      %vm2554 = vmor %vm2552, %vm2553
      %v2555 = vsel %vm2554, %v2547, %v2551
      %v2556 = vand.u32 2147483647, %v2483
      %vm2557 = vcmp.eq.f32.partialorder %v2556, 8.507059e+37
      %v2558 = vand.u32 %v2483, 2147483648
      %v2559 = vor.u32 1.1754944e-38, %v2558
      %v2560 = vsel %vm2557, %v2559, %v2555
      %v2561 = vmul.f32 1.0, %v2560
      %v2562 = vrcp.pop %v2484
      %v2563 = vmul.f32 %v2484, %v2562
      %v2564 = vsub.f32 1.0, %v2563
      %v2565 = vmul.f32 %v2562, %v2564
      %v2566 = vadd.f32 %v2562, %v2565
      %vm2567 = vweird.f32 %v2484
      %vm2568 = vweird.f32 %v2562
      %vm2569 = vmor %vm2567, %vm2568
      %v2570 = vsel %vm2569, %v2562, %v2566
      %v2571 = vand.u32 2147483647, %v2484
      %vm2572 = vcmp.eq.f32.partialorder %v2571, 8.507059e+37
      %v2573 = vand.u32 %v2484, 2147483648
      %v2574 = vor.u32 1.1754944e-38, %v2573
      %v2575 = vsel %vm2572, %v2574, %v2570
      %v2576 = vmul.f32 1.0, %v2575
      %v2577 = vrcp.pop %v2485
      %v2578 = vmul.f32 %v2485, %v2577
      %v2579 = vsub.f32 1.0, %v2578
      %v2580 = vmul.f32 %v2577, %v2579
      %v2581 = vadd.f32 %v2577, %v2580
      %vm2582 = vweird.f32 %v2485
      %vm2583 = vweird.f32 %v2577
      %vm2584 = vmor %vm2582, %vm2583
      %v2585 = vsel %vm2584, %v2577, %v2581
      %v2586 = vand.u32 2147483647, %v2485
      %vm2587 = vcmp.eq.f32.partialorder %v2586, 8.507059e+37
      %v2588 = vand.u32 %v2485, 2147483648
      %v2589 = vor.u32 1.1754944e-38, %v2588
      %v2590 = vsel %vm2587, %v2589, %v2585
      %v2591 = vmul.f32 1.0, %v2590
      %v2592 = vrcp.pop %v2486
      %v2593 = vmul.f32 %v2486, %v2592
      %v2594 = vsub.f32 1.0, %v2593
      %v2595 = vmul.f32 %v2592, %v2594
      %v2596 = vadd.f32 %v2592, %v2595
      %vm2597 = vweird.f32 %v2486
      %vm2598 = vweird.f32 %v2592
      %vm2599 = vmor %vm2597, %vm2598
      %v2600 = vsel %vm2599, %v2592, %v2596
      %v2601 = vand.u32 2147483647, %v2486
      %vm2602 = vcmp.eq.f32.partialorder %v2601, 8.507059e+37
      %v2603 = vand.u32 %v2486, 2147483648
      %v2604 = vor.u32 1.1754944e-38, %v2603
      %v2605 = vsel %vm2602, %v2604, %v2600
      %v2606 = vmul.f32 1.0, %v2605
      %v2607 = vrcp.pop %v2487
      %v2608 = vmul.f32 %v2487, %v2607
      %v2609 = vsub.f32 1.0, %v2608
      %v2610 = vmul.f32 %v2607, %v2609
      %v2611 = vadd.f32 %v2607, %v2610
      %vm2612 = vweird.f32 %v2487
      %vm2613 = vweird.f32 %v2607
      %vm2614 = vmor %vm2612, %vm2613
      %v2615 = vsel %vm2614, %v2607, %v2611
      %v2616 = vand.u32 2147483647, %v2487
      %vm2617 = vcmp.eq.f32.partialorder %v2616, 8.507059e+37
      %v2618 = vand.u32 %v2487, 2147483648
      %v2619 = vor.u32 1.1754944e-38, %v2618
      %v2620 = vsel %vm2617, %v2619, %v2615
      %v2621 = vmul.f32 1.0, %v2620
      %v2622 = vrcp.pop %v2488
      %v2623 = vmul.f32 %v2488, %v2622
      %v2624 = vsub.f32 1.0, %v2623
      %v2625 = vmul.f32 %v2622, %v2624
      %v2626 = vadd.f32 %v2622, %v2625
      %vm2627 = vweird.f32 %v2488
      %vm2628 = vweird.f32 %v2622
      %vm2629 = vmor %vm2627, %vm2628
      %v2630 = vsel %vm2629, %v2622, %v2626
      %v2631 = vand.u32 2147483647, %v2488
      %vm2632 = vcmp.eq.f32.partialorder %v2631, 8.507059e+37
      %v2633 = vand.u32 %v2488, 2147483648
      %v2634 = vor.u32 1.1754944e-38, %v2633
      %v2635 = vsel %vm2632, %v2634, %v2630
      %v2636 = vmul.f32 1.0, %v2635
      %v2637 = vrcp.pop %v2489
      %v2638 = vmul.f32 %v2489, %v2637
      %v2639 = vsub.f32 1.0, %v2638
      %v2640 = vmul.f32 %v2637, %v2639
      %v2641 = vadd.f32 %v2637, %v2640
      %vm2642 = vweird.f32 %v2489
      %vm2643 = vweird.f32 %v2637
      %vm2644 = vmor %vm2642, %vm2643
      %v2645 = vsel %vm2644, %v2637, %v2641
      %v2646 = vand.u32 2147483647, %v2489
      %vm2647 = vcmp.eq.f32.partialorder %v2646, 8.507059e+37
      %v2648 = vand.u32 %v2489, 2147483648
      %v2649 = vor.u32 1.1754944e-38, %v2648
      %v2650 = vsel %vm2647, %v2649, %v2645
      %v2651 = vmul.f32 1.0, %v2650
      %v2652 = vrcp.pop %v2490
      %v2653 = vmul.f32 %v2490, %v2652
      %v2654 = vsub.f32 1.0, %v2653
      %v2655 = vmul.f32 %v2652, %v2654
      %v2656 = vadd.f32 %v2652, %v2655
      %vm2657 = vweird.f32 %v2490
      %vm2658 = vweird.f32 %v2652
      %vm2659 = vmor %vm2657, %vm2658
      %v2660 = vsel %vm2659, %v2652, %v2656
      %v2661 = vand.u32 2147483647, %v2490
      %vm2662 = vcmp.eq.f32.partialorder %v2661, 8.507059e+37
      %v2663 = vand.u32 %v2490, 2147483648
      %v2664 = vor.u32 1.1754944e-38, %v2663
      %v2665 = vsel %vm2662, %v2664, %v2660
      %v2666 = vmul.f32 1.0, %v2665
      %v2667 = vrcp.pop %v2491
      %v2668 = vmul.f32 %v2491, %v2667
      %v2669 = vsub.f32 1.0, %v2668
      %v2670 = vmul.f32 %v2667, %v2669
      %v2671 = vadd.f32 %v2667, %v2670
      %vm2672 = vweird.f32 %v2491
      %vm2673 = vweird.f32 %v2667
      %vm2674 = vmor %vm2672, %vm2673
      %v2675 = vsel %vm2674, %v2667, %v2671
      %v2676 = vand.u32 2147483647, %v2491
      %vm2677 = vcmp.eq.f32.partialorder %v2676, 8.507059e+37
      %v2678 = vand.u32 %v2491, 2147483648
      %v2679 = vor.u32 1.1754944e-38, %v2678
      %v2680 = vsel %vm2677, %v2679, %v2675
      %v2681 = vmul.f32 1.0, %v2680
      %v2682 = vrcp.pop %v2492
      %v2683 = vmul.f32 %v2492, %v2682
      %v2684 = vsub.f32 1.0, %v2683
      %v2685 = vmul.f32 %v2682, %v2684
      %v2686 = vadd.f32 %v2682, %v2685
      %vm2687 = vweird.f32 %v2492
      %vm2688 = vweird.f32 %v2682
      %vm2689 = vmor %vm2687, %vm2688
      %v2690 = vsel %vm2689, %v2682, %v2686
      %v2691 = vand.u32 2147483647, %v2492
      %vm2692 = vcmp.eq.f32.partialorder %v2691, 8.507059e+37
      %v2693 = vand.u32 %v2492, 2147483648
      %v2694 = vor.u32 1.1754944e-38, %v2693
      %v2695 = vsel %vm2692, %v2694, %v2690
      %v2696 = vmul.f32 1.0, %v2695
      %v2697 = vrcp.pop %v2493
      %v2698 = vmul.f32 %v2493, %v2697
      %v2699 = vsub.f32 1.0, %v2698
      %v2700 = vmul.f32 %v2697, %v2699
      %v2701 = vadd.f32 %v2697, %v2700
      %vm2702 = vweird.f32 %v2493
      %vm2703 = vweird.f32 %v2697
      %vm2704 = vmor %vm2702, %vm2703
      %v2705 = vsel %vm2704, %v2697, %v2701
      %v2706 = vand.u32 2147483647, %v2493
      %vm2707 = vcmp.eq.f32.partialorder %v2706, 8.507059e+37
      %v2708 = vand.u32 %v2493, 2147483648
      %v2709 = vor.u32 1.1754944e-38, %v2708
      %v2710 = vsel %vm2707, %v2709, %v2705
      %v2711 = vmul.f32 1.0, %v2710
      %v2712 = vrcp.pop %v2494
      %v2713 = vmul.f32 %v2494, %v2712
      %v2714 = vsub.f32 1.0, %v2713
      %v2715 = vmul.f32 %v2712, %v2714
      %v2716 = vadd.f32 %v2712, %v2715
      %vm2717 = vweird.f32 %v2494
      %vm2718 = vweird.f32 %v2712
      %vm2719 = vmor %vm2717, %vm2718
      %v2720 = vsel %vm2719, %v2712, %v2716
      %v2721 = vand.u32 2147483647, %v2494
      %vm2722 = vcmp.eq.f32.partialorder %v2721, 8.507059e+37
      %v2723 = vand.u32 %v2494, 2147483648
      %v2724 = vor.u32 1.1754944e-38, %v2723
      %v2725 = vsel %vm2722, %v2724, %v2720
      %v2726 = vmul.f32 1.0, %v2725
      %v2727 = vrcp.pop %v2495
      %v2728 = vmul.f32 %v2495, %v2727
      %v2729 = vsub.f32 1.0, %v2728
      %v2730 = vmul.f32 %v2727, %v2729
      %v2731 = vadd.f32 %v2727, %v2730
      %vm2732 = vweird.f32 %v2495
      %vm2733 = vweird.f32 %v2727
      %vm2734 = vmor %vm2732, %vm2733
      %v2735 = vsel %vm2734, %v2727, %v2731
      %v2736 = vand.u32 2147483647, %v2495
      %vm2737 = vcmp.eq.f32.partialorder %v2736, 8.507059e+37
      %v2738 = vand.u32 %v2495, 2147483648
      %v2739 = vor.u32 1.1754944e-38, %v2738
      %v2740 = vsel %vm2737, %v2739, %v2735
      %v2741 = vmul.f32 1.0, %v2740
      %v2742 = vrcp.pop %v2496
      %v2743 = vmul.f32 %v2496, %v2742
      %v2744 = vsub.f32 1.0, %v2743
      %v2745 = vmul.f32 %v2742, %v2744
      %v2746 = vadd.f32 %v2742, %v2745
      %vm2747 = vweird.f32 %v2496
      %vm2748 = vweird.f32 %v2742
      %vm2749 = vmor %vm2747, %vm2748
      %v2750 = vsel %vm2749, %v2742, %v2746
      %v2751 = vand.u32 2147483647, %v2496
      %vm2752 = vcmp.eq.f32.partialorder %v2751, 8.507059e+37
      %v2753 = vand.u32 %v2496, 2147483648
      %v2754 = vor.u32 1.1754944e-38, %v2753
      %v2755 = vsel %vm2752, %v2754, %v2750
      %v2756 = vmul.f32 1.0, %v2755
      %v2757 = vrcp.pop %v2497
      %v2758 = vmul.f32 %v2497, %v2757
      %v2759 = vsub.f32 1.0, %v2758
      %v2760 = vmul.f32 %v2757, %v2759
      %v2761 = vadd.f32 %v2757, %v2760
      %vm2762 = vweird.f32 %v2497
      %vm2763 = vweird.f32 %v2757
      %vm2764 = vmor %vm2762, %vm2763
      %v2765 = vsel %vm2764, %v2757, %v2761
      %v2766 = vand.u32 2147483647, %v2497
      %vm2767 = vcmp.eq.f32.partialorder %v2766, 8.507059e+37
      %v2768 = vand.u32 %v2497, 2147483648
      %v2769 = vor.u32 1.1754944e-38, %v2768
      %v2770 = vsel %vm2767, %v2769, %v2765
      %v2771 = vmul.f32 1.0, %v2770
      %v2772 = vrcp.pop %v2498
      %v2773 = vmul.f32 %v2498, %v2772
      %v2774 = vsub.f32 1.0, %v2773
      %v2775 = vmul.f32 %v2772, %v2774
      %v2776 = vadd.f32 %v2772, %v2775
      %vm2777 = vweird.f32 %v2498
      %vm2778 = vweird.f32 %v2772
      %vm2779 = vmor %vm2777, %vm2778
      %v2780 = vsel %vm2779, %v2772, %v2776
      %v2781 = vand.u32 2147483647, %v2498
      %vm2782 = vcmp.eq.f32.partialorder %v2781, 8.507059e+37
      %v2783 = vand.u32 %v2498, 2147483648
      %v2784 = vor.u32 1.1754944e-38, %v2783
      %v2785 = vsel %vm2782, %v2784, %v2780
      %v2786 = vmul.f32 1.0, %v2785
      %v2787 = vrcp.pop %v2499
      %v2788 = vmul.f32 %v2499, %v2787
      %v2789 = vsub.f32 1.0, %v2788
      %v2790 = vmul.f32 %v2787, %v2789
      %v2791 = vadd.f32 %v2787, %v2790
      %vm2792 = vweird.f32 %v2499
      %vm2793 = vweird.f32 %v2787
      %vm2794 = vmor %vm2792, %vm2793
      %v2795 = vsel %vm2794, %v2787, %v2791
      %v2796 = vand.u32 2147483647, %v2499
      %vm2797 = vcmp.eq.f32.partialorder %v2796, 8.507059e+37
      %v2798 = vand.u32 %v2499, 2147483648
      %v2799 = vor.u32 1.1754944e-38, %v2798
      %v2800 = vsel %vm2797, %v2799, %v2795
      %v2801 = vmul.f32 1.0, %v2800
      %v2802 = vrcp.pop %v2500
      %v2803 = vmul.f32 %v2500, %v2802
      %v2804 = vsub.f32 1.0, %v2803
      %v2805 = vmul.f32 %v2802, %v2804
      %v2806 = vadd.f32 %v2802, %v2805
      %vm2807 = vweird.f32 %v2500
      %vm2808 = vweird.f32 %v2802
      %vm2809 = vmor %vm2807, %vm2808
      %v2810 = vsel %vm2809, %v2802, %v2806
      %v2811 = vand.u32 2147483647, %v2500
      %vm2812 = vcmp.eq.f32.partialorder %v2811, 8.507059e+37
      %v2813 = vand.u32 %v2500, 2147483648
      %v2814 = vor.u32 1.1754944e-38, %v2813
      %v2815 = vsel %vm2812, %v2814, %v2810
      %v2816 = vmul.f32 1.0, %v2815
      %v2817 = vrcp.pop %v2501
      %v2818 = vmul.f32 %v2501, %v2817
      %v2819 = vsub.f32 1.0, %v2818
      %v2820 = vmul.f32 %v2817, %v2819
      %v2821 = vadd.f32 %v2817, %v2820
      %vm2822 = vweird.f32 %v2501
      %vm2823 = vweird.f32 %v2817
      %vm2824 = vmor %vm2822, %vm2823
      %v2825 = vsel %vm2824, %v2817, %v2821
      %v2826 = vand.u32 2147483647, %v2501
      %vm2827 = vcmp.eq.f32.partialorder %v2826, 8.507059e+37
      %v2828 = vand.u32 %v2501, 2147483648
      %v2829 = vor.u32 1.1754944e-38, %v2828
      %v2830 = vsel %vm2827, %v2829, %v2825
      %v2831 = vmul.f32 1.0, %v2830
      %v2832 = vrcp.pop %v2502
      %v2833 = vmul.f32 %v2502, %v2832
      %v2834 = vsub.f32 1.0, %v2833
      %v2835 = vmul.f32 %v2832, %v2834
      %v2836 = vadd.f32 %v2832, %v2835
      %vm2837 = vweird.f32 %v2502
      %vm2838 = vweird.f32 %v2832
      %vm2839 = vmor %vm2837, %vm2838
      %v2840 = vsel %vm2839, %v2832, %v2836
      %v2841 = vand.u32 2147483647, %v2502
      %vm2842 = vcmp.eq.f32.partialorder %v2841, 8.507059e+37
      %v2843 = vand.u32 %v2502, 2147483648
      %v2844 = vor.u32 1.1754944e-38, %v2843
      %v2845 = vsel %vm2842, %v2844, %v2840
      %v2846 = vmul.f32 1.0, %v2845
      %v2847 = vrcp.pop %v2503
      %v2848 = vmul.f32 %v2503, %v2847
      %v2849 = vsub.f32 1.0, %v2848
      %v2850 = vmul.f32 %v2847, %v2849
      %v2851 = vadd.f32 %v2847, %v2850
      %vm2852 = vweird.f32 %v2503
      %vm2853 = vweird.f32 %v2847
      %vm2854 = vmor %vm2852, %vm2853
      %v2855 = vsel %vm2854, %v2847, %v2851
      %v2856 = vand.u32 2147483647, %v2503
      %vm2857 = vcmp.eq.f32.partialorder %v2856, 8.507059e+37
      %v2858 = vand.u32 %v2503, 2147483648
      %v2859 = vor.u32 1.1754944e-38, %v2858
      %v2860 = vsel %vm2857, %v2859, %v2855
      %v2861 = vmul.f32 1.0, %v2860
      %v2862 = vrcp.pop %v2504
      %v2863 = vmul.f32 %v2504, %v2862
      %v2864 = vsub.f32 1.0, %v2863
      %v2865 = vmul.f32 %v2862, %v2864
      %v2866 = vadd.f32 %v2862, %v2865
      %vm2867 = vweird.f32 %v2504
      %vm2868 = vweird.f32 %v2862
      %vm2869 = vmor %vm2867, %vm2868
      %v2870 = vsel %vm2869, %v2862, %v2866
      %v2871 = vand.u32 2147483647, %v2504
      %vm2872 = vcmp.eq.f32.partialorder %v2871, 8.507059e+37
      %v2873 = vand.u32 %v2504, 2147483648
      %v2874 = vor.u32 1.1754944e-38, %v2873
      %v2875 = vsel %vm2872, %v2874, %v2870
      %v2876 = vmul.f32 1.0, %v2875
      %v2877 = vrcp.pop %v2505
      %v2878 = vmul.f32 %v2505, %v2877
      %v2879 = vsub.f32 1.0, %v2878
      %v2880 = vmul.f32 %v2877, %v2879
      %v2881 = vadd.f32 %v2877, %v2880
      %vm2882 = vweird.f32 %v2505
      %vm2883 = vweird.f32 %v2877
      %vm2884 = vmor %vm2882, %vm2883
      %v2885 = vsel %vm2884, %v2877, %v2881
      %v2886 = vand.u32 2147483647, %v2505
      %vm2887 = vcmp.eq.f32.partialorder %v2886, 8.507059e+37
      %v2888 = vand.u32 %v2505, 2147483648
      %v2889 = vor.u32 1.1754944e-38, %v2888
      %v2890 = vsel %vm2887, %v2889, %v2885
      %v2891 = vmul.f32 1.0, %v2890
      %v2892 = vrcp.pop %v2506
      %v2893 = vmul.f32 %v2506, %v2892
      %v2894 = vsub.f32 1.0, %v2893
      %v2895 = vmul.f32 %v2892, %v2894
      %v2896 = vadd.f32 %v2892, %v2895
      %vm2897 = vweird.f32 %v2506
      %vm2898 = vweird.f32 %v2892
      %vm2899 = vmor %vm2897, %vm2898
      %v2900 = vsel %vm2899, %v2892, %v2896
      %v2901 = vand.u32 2147483647, %v2506
      %vm2902 = vcmp.eq.f32.partialorder %v2901, 8.507059e+37
      %v2903 = vand.u32 %v2506, 2147483648
      %v2904 = vor.u32 1.1754944e-38, %v2903
      %v2905 = vsel %vm2902, %v2904, %v2900
      %v2906 = vmul.f32 1.0, %v2905
      %v2907 = vrcp.pop %v2507
      %v2908 = vmul.f32 %v2507, %v2907
      %v2909 = vsub.f32 1.0, %v2908
      %v2910 = vmul.f32 %v2907, %v2909
      %v2911 = vadd.f32 %v2907, %v2910
      %vm2912 = vweird.f32 %v2507
      %vm2913 = vweird.f32 %v2907
      %vm2914 = vmor %vm2912, %vm2913
      %v2915 = vsel %vm2914, %v2907, %v2911
      %v2916 = vand.u32 2147483647, %v2507
      %vm2917 = vcmp.eq.f32.partialorder %v2916, 8.507059e+37
      %v2918 = vand.u32 %v2507, 2147483648
      %v2919 = vor.u32 1.1754944e-38, %v2918
      %v2920 = vsel %vm2917, %v2919, %v2915
      %v2921 = vmul.f32 1.0, %v2920
      %v2922 = vrcp.pop %v2508
      %v2923 = vmul.f32 %v2508, %v2922
      %v2924 = vsub.f32 1.0, %v2923
      %v2925 = vmul.f32 %v2922, %v2924
      %v2926 = vadd.f32 %v2922, %v2925
      %vm2927 = vweird.f32 %v2508
      %vm2928 = vweird.f32 %v2922
      %vm2929 = vmor %vm2927, %vm2928
      %v2930 = vsel %vm2929, %v2922, %v2926
      %v2931 = vand.u32 2147483647, %v2508
      %vm2932 = vcmp.eq.f32.partialorder %v2931, 8.507059e+37
      %v2933 = vand.u32 %v2508, 2147483648
      %v2934 = vor.u32 1.1754944e-38, %v2933
      %v2935 = vsel %vm2932, %v2934, %v2930
      %v2936 = vmul.f32 1.0, %v2935
      %v2937 = vrcp.pop %v2509
      %v2938 = vmul.f32 %v2509, %v2937
      %v2939 = vsub.f32 1.0, %v2938
      %v2940 = vmul.f32 %v2937, %v2939
      %v2941 = vadd.f32 %v2937, %v2940
      %vm2942 = vweird.f32 %v2509
      %vm2943 = vweird.f32 %v2937
      %vm2944 = vmor %vm2942, %vm2943
      %v2945 = vsel %vm2944, %v2937, %v2941
      %v2946 = vand.u32 2147483647, %v2509
      %vm2947 = vcmp.eq.f32.partialorder %v2946, 8.507059e+37
      %v2948 = vand.u32 %v2509, 2147483648
      %v2949 = vor.u32 1.1754944e-38, %v2948
      %v2950 = vsel %vm2947, %v2949, %v2945
      %v2951 = vmul.f32 1.0, %v2950
      %v2952 = vrcp.pop %v2510
      %v2953 = vmul.f32 %v2510, %v2952
      %v2954 = vsub.f32 1.0, %v2953
      %v2955 = vmul.f32 %v2952, %v2954
      %v2956 = vadd.f32 %v2952, %v2955
      %vm2957 = vweird.f32 %v2510
      %vm2958 = vweird.f32 %v2952
      %vm2959 = vmor %vm2957, %vm2958
      %v2960 = vsel %vm2959, %v2952, %v2956
      %v2961 = vand.u32 2147483647, %v2510
      %vm2962 = vcmp.eq.f32.partialorder %v2961, 8.507059e+37
      %v2963 = vand.u32 %v2510, 2147483648
      %v2964 = vor.u32 1.1754944e-38, %v2963
      %v2965 = vsel %vm2962, %v2964, %v2960
      %v2966 = vmul.f32 1.0, %v2965
      %v2967 = vrcp.pop %v2511
      %v2968 = vmul.f32 %v2511, %v2967
      %v2969 = vsub.f32 1.0, %v2968
      %v2970 = vmul.f32 %v2967, %v2969
      %v2971 = vadd.f32 %v2967, %v2970
      %vm2972 = vweird.f32 %v2511
      %vm2973 = vweird.f32 %v2967
      %vm2974 = vmor %vm2972, %vm2973
      %v2975 = vsel %vm2974, %v2967, %v2971
      %v2976 = vand.u32 2147483647, %v2511
      %vm2977 = vcmp.eq.f32.partialorder %v2976, 8.507059e+37
      %v2978 = vand.u32 %v2511, 2147483648
      %v2979 = vor.u32 1.1754944e-38, %v2978
      %v2980 = vsel %vm2977, %v2979, %v2975
      %v2981 = vmul.f32 1.0, %v2980
      %v2982 = vrcp.pop %v2512
      %v2983 = vmul.f32 %v2512, %v2982
      %v2984 = vsub.f32 1.0, %v2983
      %v2985 = vmul.f32 %v2982, %v2984
      %v2986 = vadd.f32 %v2982, %v2985
      %vm2987 = vweird.f32 %v2512
      %vm2988 = vweird.f32 %v2982
      %vm2989 = vmor %vm2987, %vm2988
      %v2990 = vsel %vm2989, %v2982, %v2986
      %v2991 = vand.u32 2147483647, %v2512
      %vm2992 = vcmp.eq.f32.partialorder %v2991, 8.507059e+37
      %v2993 = vand.u32 %v2512, 2147483648
      %v2994 = vor.u32 1.1754944e-38, %v2993
      %v2995 = vsel %vm2992, %v2994, %v2990
      %v2996 = vmul.f32 1.0, %v2995
      %v2997 = vrcp.pop %v2513
      %v2998 = vmul.f32 %v2513, %v2997
      %v2999 = vsub.f32 1.0, %v2998
      %v3000 = vmul.f32 %v2997, %v2999
      %v3001 = vadd.f32 %v2997, %v3000
      %vm3002 = vweird.f32 %v2513
      %vm3003 = vweird.f32 %v2997
      %vm3004 = vmor %vm3002, %vm3003
      %v3005 = vsel %vm3004, %v2997, %v3001
      %v3006 = vand.u32 2147483647, %v2513
      %vm3007 = vcmp.eq.f32.partialorder %v3006, 8.507059e+37
      %v3008 = vand.u32 %v2513, 2147483648
      %v3009 = vor.u32 1.1754944e-38, %v3008
      %v3010 = vsel %vm3007, %v3009, %v3005
      %v3011 = vmul.f32 1.0, %v3010
      %v3012 = vrcp.pop %v2514
      %v3013 = vmul.f32 %v2514, %v3012
      %v3014 = vsub.f32 1.0, %v3013
      %v3015 = vmul.f32 %v3012, %v3014
      %v3016 = vadd.f32 %v3012, %v3015
      %vm3017 = vweird.f32 %v2514
      %vm3018 = vweird.f32 %v3012
      %vm3019 = vmor %vm3017, %vm3018
      %v3020 = vsel %vm3019, %v3012, %v3016
      %v3021 = vand.u32 2147483647, %v2514
      %vm3022 = vcmp.eq.f32.partialorder %v3021, 8.507059e+37
      %v3023 = vand.u32 %v2514, 2147483648
      %v3024 = vor.u32 1.1754944e-38, %v3023
      %v3025 = vsel %vm3022, %v3024, %v3020
      %v3026 = vmul.f32 1.0, %v3025
      %v3027 = vrcp.pop %v2515
      %v3028 = vmul.f32 %v2515, %v3027
      %v3029 = vsub.f32 1.0, %v3028
      %v3030 = vmul.f32 %v3027, %v3029
      %v3031 = vadd.f32 %v3027, %v3030
      %vm3032 = vweird.f32 %v2515
      %vm3033 = vweird.f32 %v3027
      %vm3034 = vmor %vm3032, %vm3033
      %v3035 = vsel %vm3034, %v3027, %v3031
      %v3036 = vand.u32 2147483647, %v2515
      %vm3037 = vcmp.eq.f32.partialorder %v3036, 8.507059e+37
      %v3038 = vand.u32 %v2515, 2147483648
      %v3039 = vor.u32 1.1754944e-38, %v3038
      %v3040 = vsel %vm3037, %v3039, %v3035
      %v3041 = vmul.f32 1.0, %v3040
      %v3042 = vrcp.pop %v2516
      %v3043 = vmul.f32 %v2516, %v3042
      %v3044 = vsub.f32 1.0, %v3043
      %v3045 = vmul.f32 %v3042, %v3044
      %v3046 = vadd.f32 %v3042, %v3045
      %vm3047 = vweird.f32 %v2516
      %vm3048 = vweird.f32 %v3042
      %vm3049 = vmor %vm3047, %vm3048
      %v3050 = vsel %vm3049, %v3042, %v3046
      %v3051 = vand.u32 2147483647, %v2516
      %vm3052 = vcmp.eq.f32.partialorder %v3051, 8.507059e+37
      %v3053 = vand.u32 %v2516, 2147483648
      %v3054 = vor.u32 1.1754944e-38, %v3053
      %v3055 = vsel %vm3052, %v3054, %v3050
      %v3056 = vmul.f32 1.0, %v3055
      %v3057 = vmul.f32 %v2337, %v2531
      %v3058 = vmul.f32 %v2338, %v2546
      %v3059 = vmul.f32 %v2339, %v2561
      %v3060 = vmul.f32 %v2340, %v2576
      %v3061 = vmul.f32 %v2341, %v2591
      %v3062 = vmul.f32 %v2342, %v2606
      %v3063 = vmul.f32 %v2343, %v2621
      %v3064 = vmul.f32 %v2344, %v2636
      %v3065 = vmul.f32 %v2345, %v2651
      %v3066 = vmul.f32 %v2346, %v2666
      %v3067 = vmul.f32 %v2347, %v2681
      %v3068 = vmul.f32 %v2348, %v2696
      %v3069 = vmul.f32 %v2349, %v2711
      %v3070 = vmul.f32 %v2350, %v2726
      %v3071 = vmul.f32 %v2351, %v2741
      %v3072 = vmul.f32 %v2352, %v2756
      %v3073 = vmul.f32 %v2353, %v2771
      %v3074 = vmul.f32 %v2354, %v2786
      %v3075 = vmul.f32 %v2355, %v2801
      %v3076 = vmul.f32 %v2356, %v2816
      %v3077 = vmul.f32 %v2357, %v2831
      %v3078 = vmul.f32 %v2358, %v2846
      %v3079 = vmul.f32 %v2359, %v2861
      %v3080 = vmul.f32 %v2360, %v2876
      %v3081 = vmul.f32 %v2361, %v2891
      %v3082 = vmul.f32 %v2362, %v2906
      %v3083 = vmul.f32 %v2363, %v2921
      %v3084 = vmul.f32 %v2364, %v2936
      %v3085 = vmul.f32 %v2365, %v2951
      %v3086 = vmul.f32 %v2366, %v2966
      %v3087 = vmul.f32 %v2367, %v2981
      %v3088 = vmul.f32 %v2368, %v2996
      %v3089 = vmul.f32 %v2369, %v3011
      %v3090 = vmul.f32 %v2370, %v3026
      %v3091 = vmul.f32 %v2371, %v3041
      %v3092 = vmul.f32 %v2372, %v3056
      %v3093 = vadd.f32 %v1093, %v3057
      %v3094 = vadd.f32 %v1094, %v3058
      %v3095 = vadd.f32 %v1095, %v3059
      %v3096 = vadd.f32 %v1096, %v3060
      %v3097 = vadd.f32 %v1097, %v3061
      %v3098 = vadd.f32 %v1098, %v3062
      %v3099 = vadd.f32 %v1099, %v3063
      %v3100 = vadd.f32 %v1100, %v3064
      %v3101 = vadd.f32 %v1101, %v3065
      %v3102 = vadd.f32 %v1102, %v3066
      %v3103 = vadd.f32 %v1103, %v3067
      %v3104 = vadd.f32 %v1104, %v3068
      %v3105 = vadd.f32 %v1105, %v3069
      %v3106 = vadd.f32 %v1106, %v3070
      %v3107 = vadd.f32 %v1107, %v3071
      %v3108 = vadd.f32 %v1108, %v3072
      %v3109 = vadd.f32 %v1109, %v3073
      %v3110 = vadd.f32 %v1110, %v3074
      %v3111 = vadd.f32 %v1111, %v3075
      %v3112 = vadd.f32 %v1112, %v3076
      %v3113 = vadd.f32 %v1113, %v3077
      %v3114 = vadd.f32 %v1114, %v3078
      %v3115 = vadd.f32 %v1115, %v3079
      %v3116 = vadd.f32 %v1116, %v3080
      %v3117 = vadd.f32 %v1117, %v3081
      %v3118 = vadd.f32 %v1118, %v3082
      %v3119 = vadd.f32 %v1119, %v3083
      %v3120 = vadd.f32 %v1120, %v3084
      %v3121 = vadd.f32 %v1121, %v3085
      %v3122 = vadd.f32 %v1122, %v3086
      %v3123 = vadd.f32 %v1123, %v3087
      %v3124 = vadd.f32 %v1124, %v3088
      %v3125 = vadd.f32 %v1125, %v3089
      %v3126 = vadd.f32 %v1126, %v3090
      %v3127 = vadd.f32 %v1127, %v3091
      %v3128 = vadd.f32 %v1128, %v3092
      %3129 = vst.msk [vmem:[%s170] sm:$0xff] %vm283, %v3093
      %3130 = vst.msk [vmem:[%s170 + $0x8] sm:$0xff] %vm283, %v3094
      %3131 = vst.msk [vmem:[%s170 + $0x10] sm:$0xff] %vm283, %v3095
      %3132 = vst.msk [vmem:[%s170 + $0x18] sm:$0xff] %vm283, %v3096
      %3133 = vst.msk [vmem:[%s170 + $0x20] sm:$0xff] %vm283, %v3097
      %3134 = vst.msk [vmem:[%s170 + $0x28] sm:$0xff] %vm283, %v3098
      %3135 = vst.msk [vmem:[%s170 + $0x30] sm:$0xff] %vm283, %v3099
      %3136 = vst.msk [vmem:[%s170 + $0x38] sm:$0xff] %vm283, %v3100
      %3137 = vst.msk [vmem:[%s170 + $0x40] sm:$0xff] %vm283, %v3101
      %3138 = vst.msk [vmem:[%s170 + $0x48] sm:$0xff] %vm283, %v3102
      %3139 = vst.msk [vmem:[%s170 + $0x50] sm:$0xff] %vm283, %v3103
      %3140 = vst.msk [vmem:[%s170 + $0x58] sm:$0xff] %vm283, %v3104
      %3141 = vst.msk [vmem:[%s170 + $0x60] sm:$0xff] %vm283, %v3105
      %3142 = vst.msk [vmem:[%s170 + $0x68] sm:$0xff] %vm283, %v3106
      %3143 = vst.msk [vmem:[%s170 + $0x70] sm:$0xff] %vm283, %v3107
      %3144 = vst.msk [vmem:[%s170 + $0x78] sm:$0xff] %vm283, %v3108
      %3145 = vst.msk [vmem:[%s170 + $0x80] sm:$0xff] %vm283, %v3109
      %3146 = vst.msk [vmem:[%s170 + $0x88] sm:$0xff] %vm283, %v3110
      %3147 = vst.msk [vmem:[%s170 + $0x90] sm:$0xff] %vm283, %v3111
      %3148 = vst.msk [vmem:[%s170 + $0x98] sm:$0xff] %vm283, %v3112
      %3149 = vst.msk [vmem:[%s170 + $0xa0] sm:$0xff] %vm283, %v3113
      %3150 = vst.msk [vmem:[%s170 + $0xa8] sm:$0xff] %vm283, %v3114
      %3151 = vst.msk [vmem:[%s170 + $0xb0] sm:$0xff] %vm283, %v3115
      %3152 = vst.msk [vmem:[%s170 + $0xb8] sm:$0xff] %vm283, %v3116
      %3153 = vst.msk [vmem:[%s170 + $0xc0] sm:$0xff] %vm283, %v3117
      %3154 = vst.msk [vmem:[%s170 + $0xc8] sm:$0xff] %vm283, %v3118
      %3155 = vst.msk [vmem:[%s170 + $0xd0] sm:$0xff] %vm283, %v3119
      %3156 = vst.msk [vmem:[%s170 + $0xd8] sm:$0xff] %vm283, %v3120
      %3157 = vst.msk [vmem:[%s170 + $0xe0] sm:$0xff] %vm283, %v3121
      %3158 = vst.msk [vmem:[%s170 + $0xe8] sm:$0xff] %vm283, %v3122
      %3159 = vst.msk [vmem:[%s170 + $0xf0] sm:$0xff] %vm283, %v3123
      %3160 = vst.msk [vmem:[%s170 + $0xf8] sm:$0xff] %vm283, %v3124
      %3161 = vst.msk [vmem:[%s170 + $0x100] sm:$0xff] %vm283, %v3125
      %3162 = vst.msk [vmem:[%s170 + $0x108] sm:$0xff] %vm283, %v3126
      %3163 = vst.msk [vmem:[%s170 + $0x110] sm:$0xff] %vm283, %v3127
      %3164 = vst.msk [vmem:[%s170 + $0x118] sm:$0xff] %vm283, %v3128
      %p3165 = scmp.lt.s32.totalorder %s14, 1
      %s3166 = scalar_select %p3165, %s14, 1
      %s3167 = smul.addr %s3166, 36
      %s3168 = smul.addr %s3167, 8
      %s3169 = scalar_lea.vmem %s3, %s3168
      // Predicated region
      $region33: #{tpu_custom_call.1} parent=31 // pred_check
        %p3170 = pneg %p100
      $region34: #{tpu_custom_call.1} parent=31 // pred_check_branch
        %3172 = sbr.rel (%p3170) target = $region36
      $region35: #{tpu_custom_call.1} parent=31 // pred_region
        _
      $region36: #{tpu_custom_call.1} parent=31 // pred_fallthru
        _
    $region32: #{tpu_custom_call.1} parent=5 // pred_fallthru
      _
    %p3173 = scmp.le.s32.totalorder 2, %s9
    // Predicated region
    $region37: #{tpu_custom_call.1} parent=5 // pred_check
      %p3174 = pneg %p3173
    $region38: #{tpu_custom_call.1} parent=5 // pred_check_branch
      %3176 = sbr.rel (%p3174) target = $region40
    $region39: #{tpu_custom_call.1} parent=5 // pred_region
      %s3177 = ssub.s32 %s9, 2
      // Predicated region
      $region41: #{tpu_custom_call.1} parent=39 // pred_check
        %p3178 = pneg %p106
      $region42: #{tpu_custom_call.1} parent=39 // pred_check_branch
        %3180 = sbr.rel (%p3178) target = $region44
      $region43: #{tpu_custom_call.1} parent=39 // pred_region
        %p3181 = scmp.lt.s32.totalorder %s15, 1
        %s3182 = scalar_select %p3181, %s15, 1
        %s3183 = smul.addr %s3182, 36
        %s3184 = smul.addr %s3183, 8
        %s3185 = scalar_lea.vmem %s3, %s3184
      $region44: #{tpu_custom_call.1} parent=39 // pred_fallthru
        _
    $region40: #{tpu_custom_call.1} parent=5 // pred_fallthru
      _
  $region6: #{tpu_custom_call.1} parent=0 // loop_footer
    %s13 = sadd.s32 1, %s9
  $region7: #{tpu_custom_call.1} parent=0 // loop_footer_branch
    %8 = sbr.rel target = $region3
  $region8: #{tpu_custom_call.1} parent=0 // loop_exit
    _

</llo_original>
